<compile_context>
chip_gen: v7x
topology: tpu7x:2x2x1
jax: 0.10.0
libtpu: 0.0.40
codegen_flags: <defaults>
</compile_context>

<pallas_src>
import functools

import jax
import jax.numpy as jnp
from jax.experimental import pallas as pl
from jax.experimental.pallas import tpu as pltpu

EPS = 1e-5
NEG_SLOPE = 0.2


def _conv_stats_kernel(x_ref, w_ref, y_ref, sum_ref, sq_ref, *, oh, ow):
    """Per-image stride-2 3x3 conv as 9 accumulating matmuls + channel stats.

    x_ref:   (6, (oh+1)*ow, C_in)  variants: (row parity rph in {0,1}) x (kw in {0,1,2})
    w_ref:   (9, C_in, C_out)      tap order t = kh*3 + kw
    y_ref:   (1, oh*ow, C_out)     raw conv output (pre-BN)
    sum_ref: (1, 1, C_out)         per-image channel sum
    sq_ref:  (1, 1, C_out)         per-image channel sum of squares
    """
    s = oh * ow
    c_out = w_ref.shape[2]
    acc = jnp.zeros((s, c_out), jnp.float32)
    for kh in range(3):
        for kw in range(3):
            v = (kh % 2) * 3 + kw          # pre-sliced variant index
            off = (kh // 2) * ow           # +1 output-row shift for kh == 2
            lhs = x_ref[v, off:off + s, :]                       # (s, C_in)
            acc = acc + jnp.dot(lhs, w_ref[kh * 3 + kw],
                                preferred_element_type=jnp.float32)
    y_ref[0] = acc
    sum_ref[0] = jnp.sum(acc, axis=0, keepdims=True)
    sq_ref[0] = jnp.sum(acc * acc, axis=0, keepdims=True)


def _bn_act_kernel(y_ref, s_ref, t_ref, o_ref):
    """Lane-dense fused BN affine (y*s + t) + LeakyReLU(0.2)."""
    z = y_ref[...] * s_ref[...] + t_ref[...]
    o_ref[...] = jnp.maximum(z, NEG_SLOPE * z)


def _same_pad_amount(size, kernel, stride):
    out = -(-size // stride)                           # ceil(size/stride)
    total = max((out - 1) * stride + kernel - size, 0)
    lo = total // 2
    return out, lo, total - lo


def _pick_rows_tile(rows, cap=2048):
    for cand in (cap, 1024, 512, 256, 128, 64, 32, 16, 8):
        if cand <= rows and rows % cand == 0:
            return cand
    return rows


@jax.jit
def group2_forward(x_nchw, w_oihw, conv_b, bn_gamma, bn_beta):
    """x: [N,16,H,W] f32 -> LeakyReLU(BN(Conv(x))) in NCHW, [N,32,ceil(H/2),ceil(W/2)]."""
    del conv_b  # conv bias is exactly cancelled by training-mode BatchNorm.
    N, C_in, H, W = x_nchw.shape
    C_out, _, KH, KW = w_oihw.shape

    OH, pt, _ = _same_pad_amount(H, KH, 2)
    OW, pl_left, _ = _same_pad_amount(W, KW, 2)
    S = OH * OW
    S6 = (OH + 1) * OW

    # ---- XLA glue: NCHW->NHWC, TF-SAME pad, 6-variant stride-2 decomposition ----
    x_nhwc = jnp.transpose(x_nchw, (0, 2, 3, 1))
    Hp, Wp = 2 * OH + 2, 2 * OW + 2
    x_pad = jnp.pad(
        x_nhwc,
        ((0, 0), (pt, Hp - H - pt), (pl_left, Wp - W - pl_left), (0, 0)))
    variants = []
    for rph in range(2):                                 # input-row parity (kh % 2)
        rows = x_pad[:, rph:rph + 2 * OH + 1:2, :, :]    # (N, OH+1, Wp, C_in)
        for kw in range(3):                              # column tap
            v = rows[:, :, kw:kw + 2 * OW - 1:2, :]      # (N, OH+1, OW, C_in)
            variants.append(v.reshape(N, S6, C_in))
    x6 = jnp.stack(variants, axis=1).reshape(N * 6, S6, C_in)

    # PyTorch weight [OC, IC, KH, KW] -> [KH*KW, IC, OC]
    w_taps = jnp.transpose(w_oihw, (2, 3, 1, 0)).reshape(KH * KW, C_in, C_out)

    # ---- phase 1: conv + per-image channel statistics ----
    conv_fn = functools.partial(_conv_stats_kernel, oh=OH, ow=OW)
    y, sums, sumsq = pl.pallas_call(
        conv_fn,
        grid=(N,),
        in_specs=[
            pl.BlockSpec((6, S6, C_in), lambda n: (n, 0, 0)),
            pl.BlockSpec((KH * KW, C_in, C_out), lambda n: (0, 0, 0)),
        ],
        out_specs=(
            pl.BlockSpec((1, S, C_out), lambda n: (n, 0, 0)),
            pl.BlockSpec((1, 1, C_out), lambda n: (n, 0, 0)),
            pl.BlockSpec((1, 1, C_out), lambda n: (n, 0, 0)),
        ),
        out_shape=(
            jax.ShapeDtypeStruct((N, S, C_out), jnp.float32),
            jax.ShapeDtypeStruct((N, 1, C_out), jnp.float32),
            jax.ShapeDtypeStruct((N, 1, C_out), jnp.float32),
        ),
        compiler_params=pltpu.CompilerParams(dimension_semantics=("parallel",)),
    )(x6, w_taps)

    # ---- tiny XLA reduction: global batch stats + fused BN scale/shift ----
    count = jnp.float32(N * S)
    mean = jnp.sum(sums[:, 0, :], axis=0) / count
    var = jnp.maximum(jnp.sum(sumsq[:, 0, :], axis=0) / count - mean * mean, 0.0)
    scale = bn_gamma * jax.lax.rsqrt(var + EPS)
    shift = bn_beta - mean * scale

    # ---- phase 2: lane-dense normalize + LeakyReLU ----
    total = N * S * C_out
    lanes = 128 if total % 128 == 0 else C_out
    rows_flat = total // lanes
    reps = lanes // C_out
    y2 = y.reshape(rows_flat, lanes)                  # free row-major view
    s_row = jnp.tile(scale, reps).reshape(1, lanes)
    t_row = jnp.tile(shift, reps).reshape(1, lanes)

    tile_rows = _pick_rows_tile(rows_flat)
    out2 = pl.pallas_call(
        _bn_act_kernel,
        grid=(rows_flat // tile_rows,),
        in_specs=[
            pl.BlockSpec((tile_rows, lanes), lambda i: (i, 0)),
            pl.BlockSpec((1, lanes), lambda i: (0, 0)),
            pl.BlockSpec((1, lanes), lambda i: (0, 0)),
        ],
        out_specs=pl.BlockSpec((tile_rows, lanes), lambda i: (i, 0)),
        out_shape=jax.ShapeDtypeStruct((rows_flat, lanes), jnp.float32),
        compiler_params=pltpu.CompilerParams(dimension_semantics=("parallel",)),
    )(y2, s_row, t_row)

    out_nhwc = out2.reshape(N, OH, OW, C_out)
    return jnp.transpose(out_nhwc, (0, 3, 1, 2))      # NHWC -> NCHW (module layout)


def _reference(x_nchw, w_oihw, conv_b, bn_gamma, bn_beta):
    """Pure-JAX reference (same math) for a sanity check."""
    N, C_in, H, W = x_nchw.shape
    C_out, _, KH, KW = w_oihw.shape
    OH, pt, pb = _same_pad_amount(H, KH, 2)
    OW, pw_l, pw_r = _same_pad_amount(W, KW, 2)
    xp = jnp.pad(x_nchw, ((0, 0), (0, 0), (pt, pb), (pw_l, pw_r)))
    y = jax.lax.conv_general_dilated(
        xp, w_oihw, window_strides=(2, 2), padding="VALID",
        dimension_numbers=("NCHW", "OIHW", "NCHW"))
    y = y + conv_b.reshape(1, C_out, 1, 1)
    mean = jnp.mean(y, axis=(0, 2, 3), keepdims=True)
    var = jnp.mean((y - mean) ** 2, axis=(0, 2, 3), keepdims=True)
    y = (y - mean) * jax.lax.rsqrt(var + EPS)
    y = y * bn_gamma.reshape(1, C_out, 1, 1) + bn_beta.reshape(1, C_out, 1, 1)
    return jnp.where(y > 0, y, NEG_SLOPE * y)


if __name__ == "__main__":
    key = jax.random.PRNGKey(0)
    kx, kw, kb, kg, kbe = jax.random.split(key, 5)

    N, C_in, H, W = 2, 16, 16, 16
    C_out, KH, KW = 32, 3, 3

    x = jax.random.normal(kx, (N, C_in, H, W), dtype=jnp.float32)
    fan_in = C_in * KH * KW
    w = jax.random.normal(kw, (C_out, C_in, KH, KW), dtype=jnp.float32) / jnp.sqrt(fan_in)
    b = 0.1 * jax.random.normal(kb, (C_out,), dtype=jnp.float32)
    gamma = 1.0 + 0.1 * jax.random.normal(kg, (C_out,), dtype=jnp.float32)
    beta = 0.1 * jax.random.normal(kbe, (C_out,), dtype=jnp.float32)

    out = jax.block_until_ready(group2_forward(x, w, b, gamma, beta))
    ref = jax.block_until_ready(_reference(x, w, b, gamma, beta))

    assert out.shape == (N, C_out, 8, 8), out.shape
    assert jnp.allclose(out, ref, atol=1e-4, rtol=1e-4), float(jnp.max(jnp.abs(out - ref)))

    print("KERNEL_OK")
</pallas_src>

<mosaic_0001>
module attributes {stable_mosaic.version = 11 : i64} {
  func.func @_conv_stats_kernel(%arg0: i32, %arg1: memref<6x72x16xf32, #tpu.memory_space<vmem>>, %arg2: memref<9x16x32xf32, #tpu.memory_space<vmem>>, %arg3: memref<1x64x32xf32, #tpu.memory_space<vmem>>, %arg4: memref<1x1x32xf32, #tpu.memory_space<vmem>>, %arg5: memref<1x1x32xf32, #tpu.memory_space<vmem>>) attributes {dimension_semantics = [#tpu.dimension_semantics<parallel>], iteration_bounds = array<i64: 2>, scalar_prefetch = 0 : i64, scratch_operands = 0 : i64, tpu.core_type = #tpu.core_type<tc>, window_params = [{transform_indices = @transform_0, window_bounds = array<i64: 6, 72, 16>}, {pipeline_mode = #tpu.pipeline_mode<synchronous>, transform_indices = @transform_1, window_bounds = array<i64: 9, 16, 32>}, {transform_indices = @transform_2, window_bounds = array<i64: 1, 64, 32>}, {transform_indices = @transform_3, window_bounds = array<i64: 1, 1, 32>}, {transform_indices = @transform_4, window_bounds = array<i64: 1, 1, 32>}]} {
    %cst = arith.constant 0.000000e+00 : f32
    %0 = vector.broadcast %cst : f32 to vector<64x32xf32>
    %c0 = arith.constant 0 : index
    %c0_0 = arith.constant 0 : index
    %c0_1 = arith.constant 0 : index
    %1 = vector.load %arg1[%c0, %c0_0, %c0_1] : memref<6x72x16xf32, #tpu.memory_space<vmem>>, vector<1x64x16xf32>
    %2 = vector.shape_cast %1 : vector<1x64x16xf32> to vector<64x16xf32>
    %c0_2 = arith.constant 0 : index
    %c0_3 = arith.constant 0 : index
    %c0_4 = arith.constant 0 : index
    %3 = vector.load %arg2[%c0_2, %c0_3, %c0_4] : memref<9x16x32xf32, #tpu.memory_space<vmem>>, vector<1x16x32xf32>
    %4 = vector.shape_cast %3 : vector<1x16x32xf32> to vector<16x32xf32>
    %cst_5 = arith.constant dense<0.000000e+00> : vector<64x32xf32>
    %5 = tpu.matmul %2, %4, %cst_5 {dimension_numbers = #tpu.dot_dimension_numbers<[1], [0], [0], [1], [0, 0, 1, 1], [], []>} : vector<64x16xf32>, vector<16x32xf32>, vector<64x32xf32> -> vector<64x32xf32>
    %6 = arith.addf %0, %5 : vector<64x32xf32>
    %c1 = arith.constant 1 : index
    %c0_6 = arith.constant 0 : index
    %c0_7 = arith.constant 0 : index
    %7 = vector.load %arg1[%c1, %c0_6, %c0_7] : memref<6x72x16xf32, #tpu.memory_space<vmem>>, vector<1x64x16xf32>
    %8 = vector.shape_cast %7 : vector<1x64x16xf32> to vector<64x16xf32>
    %c1_8 = arith.constant 1 : index
    %c0_9 = arith.constant 0 : index
    %c0_10 = arith.constant 0 : index
    %9 = vector.load %arg2[%c1_8, %c0_9, %c0_10] : memref<9x16x32xf32, #tpu.memory_space<vmem>>, vector<1x16x32xf32>
    %10 = vector.shape_cast %9 : vector<1x16x32xf32> to vector<16x32xf32>
    %cst_11 = arith.constant dense<0.000000e+00> : vector<64x32xf32>
    %11 = tpu.matmul %8, %10, %cst_11 {dimension_numbers = #tpu.dot_dimension_numbers<[1], [0], [0], [1], [0, 0, 1, 1], [], []>} : vector<64x16xf32>, vector<16x32xf32>, vector<64x32xf32> -> vector<64x32xf32>
    %12 = arith.addf %6, %11 : vector<64x32xf32>
    %c2 = arith.constant 2 : index
    %c0_12 = arith.constant 0 : index
    %c0_13 = arith.constant 0 : index
    %13 = vector.load %arg1[%c2, %c0_12, %c0_13] : memref<6x72x16xf32, #tpu.memory_space<vmem>>, vector<1x64x16xf32>
    %14 = vector.shape_cast %13 : vector<1x64x16xf32> to vector<64x16xf32>
    %c2_14 = arith.constant 2 : index
    %c0_15 = arith.constant 0 : index
    %c0_16 = arith.constant 0 : index
    %15 = vector.load %arg2[%c2_14, %c0_15, %c0_16] : memref<9x16x32xf32, #tpu.memory_space<vmem>>, vector<1x16x32xf32>
    %16 = vector.shape_cast %15 : vector<1x16x32xf32> to vector<16x32xf32>
    %cst_17 = arith.constant dense<0.000000e+00> : vector<64x32xf32>
    %17 = tpu.matmul %14, %16, %cst_17 {dimension_numbers = #tpu.dot_dimension_numbers<[1], [0], [0], [1], [0, 0, 1, 1], [], []>} : vector<64x16xf32>, vector<16x32xf32>, vector<64x32xf32> -> vector<64x32xf32>
    %18 = arith.addf %12, %17 : vector<64x32xf32>
    %c3 = arith.constant 3 : index
    %c0_18 = arith.constant 0 : index
    %c0_19 = arith.constant 0 : index
    %19 = vector.load %arg1[%c3, %c0_18, %c0_19] : memref<6x72x16xf32, #tpu.memory_space<vmem>>, vector<1x64x16xf32>
    %20 = vector.shape_cast %19 : vector<1x64x16xf32> to vector<64x16xf32>
    %c3_20 = arith.constant 3 : index
    %c0_21 = arith.constant 0 : index
    %c0_22 = arith.constant 0 : index
    %21 = vector.load %arg2[%c3_20, %c0_21, %c0_22] : memref<9x16x32xf32, #tpu.memory_space<vmem>>, vector<1x16x32xf32>
    %22 = vector.shape_cast %21 : vector<1x16x32xf32> to vector<16x32xf32>
    %cst_23 = arith.constant dense<0.000000e+00> : vector<64x32xf32>
    %23 = tpu.matmul %20, %22, %cst_23 {dimension_numbers = #tpu.dot_dimension_numbers<[1], [0], [0], [1], [0, 0, 1, 1], [], []>} : vector<64x16xf32>, vector<16x32xf32>, vector<64x32xf32> -> vector<64x32xf32>
    %24 = arith.addf %18, %23 : vector<64x32xf32>
    %c4 = arith.constant 4 : index
    %c0_24 = arith.constant 0 : index
    %c0_25 = arith.constant 0 : index
    %25 = vector.load %arg1[%c4, %c0_24, %c0_25] : memref<6x72x16xf32, #tpu.memory_space<vmem>>, vector<1x64x16xf32>
    %26 = vector.shape_cast %25 : vector<1x64x16xf32> to vector<64x16xf32>
    %c4_26 = arith.constant 4 : index
    %c0_27 = arith.constant 0 : index
    %c0_28 = arith.constant 0 : index
    %27 = vector.load %arg2[%c4_26, %c0_27, %c0_28] : memref<9x16x32xf32, #tpu.memory_space<vmem>>, vector<1x16x32xf32>
    %28 = vector.shape_cast %27 : vector<1x16x32xf32> to vector<16x32xf32>
    %cst_29 = arith.constant dense<0.000000e+00> : vector<64x32xf32>
    %29 = tpu.matmul %26, %28, %cst_29 {dimension_numbers = #tpu.dot_dimension_numbers<[1], [0], [0], [1], [0, 0, 1, 1], [], []>} : vector<64x16xf32>, vector<16x32xf32>, vector<64x32xf32> -> vector<64x32xf32>
    %30 = arith.addf %24, %29 : vector<64x32xf32>
    %c5 = arith.constant 5 : index
    %c0_30 = arith.constant 0 : index
    %c0_31 = arith.constant 0 : index
    %31 = vector.load %arg1[%c5, %c0_30, %c0_31] : memref<6x72x16xf32, #tpu.memory_space<vmem>>, vector<1x64x16xf32>
    %32 = vector.shape_cast %31 : vector<1x64x16xf32> to vector<64x16xf32>
    %c5_32 = arith.constant 5 : index
    %c0_33 = arith.constant 0 : index
    %c0_34 = arith.constant 0 : index
    %33 = vector.load %arg2[%c5_32, %c0_33, %c0_34] : memref<9x16x32xf32, #tpu.memory_space<vmem>>, vector<1x16x32xf32>
    %34 = vector.shape_cast %33 : vector<1x16x32xf32> to vector<16x32xf32>
    %cst_35 = arith.constant dense<0.000000e+00> : vector<64x32xf32>
    %35 = tpu.matmul %32, %34, %cst_35 {dimension_numbers = #tpu.dot_dimension_numbers<[1], [0], [0], [1], [0, 0, 1, 1], [], []>} : vector<64x16xf32>, vector<16x32xf32>, vector<64x32xf32> -> vector<64x32xf32>
    %36 = arith.addf %30, %35 : vector<64x32xf32>
    %c0_36 = arith.constant 0 : index
    %c8 = arith.constant 8 : index
    %c0_37 = arith.constant 0 : index
    %37 = vector.load %arg1[%c0_36, %c8, %c0_37] : memref<6x72x16xf32, #tpu.memory_space<vmem>>, vector<1x64x16xf32>
    %38 = vector.shape_cast %37 : vector<1x64x16xf32> to vector<64x16xf32>
    %c6 = arith.constant 6 : index
    %c0_38 = arith.constant 0 : index
    %c0_39 = arith.constant 0 : index
    %39 = vector.load %arg2[%c6, %c0_38, %c0_39] : memref<9x16x32xf32, #tpu.memory_space<vmem>>, vector<1x16x32xf32>
    %40 = vector.shape_cast %39 : vector<1x16x32xf32> to vector<16x32xf32>
    %cst_40 = arith.constant dense<0.000000e+00> : vector<64x32xf32>
    %41 = tpu.matmul %38, %40, %cst_40 {dimension_numbers = #tpu.dot_dimension_numbers<[1], [0], [0], [1], [0, 0, 1, 1], [], []>} : vector<64x16xf32>, vector<16x32xf32>, vector<64x32xf32> -> vector<64x32xf32>
    %42 = arith.addf %36, %41 : vector<64x32xf32>
    %c1_41 = arith.constant 1 : index
    %c8_42 = arith.constant 8 : index
    %c0_43 = arith.constant 0 : index
    %43 = vector.load %arg1[%c1_41, %c8_42, %c0_43] : memref<6x72x16xf32, #tpu.memory_space<vmem>>, vector<1x64x16xf32>
    %44 = vector.shape_cast %43 : vector<1x64x16xf32> to vector<64x16xf32>
    %c7 = arith.constant 7 : index
    %c0_44 = arith.constant 0 : index
    %c0_45 = arith.constant 0 : index
    %45 = vector.load %arg2[%c7, %c0_44, %c0_45] : memref<9x16x32xf32, #tpu.memory_space<vmem>>, vector<1x16x32xf32>
    %46 = vector.shape_cast %45 : vector<1x16x32xf32> to vector<16x32xf32>
    %cst_46 = arith.constant dense<0.000000e+00> : vector<64x32xf32>
    %47 = tpu.matmul %44, %46, %cst_46 {dimension_numbers = #tpu.dot_dimension_numbers<[1], [0], [0], [1], [0, 0, 1, 1], [], []>} : vector<64x16xf32>, vector<16x32xf32>, vector<64x32xf32> -> vector<64x32xf32>
    %48 = arith.addf %42, %47 : vector<64x32xf32>
    %c2_47 = arith.constant 2 : index
    %c8_48 = arith.constant 8 : index
    %c0_49 = arith.constant 0 : index
    %49 = vector.load %arg1[%c2_47, %c8_48, %c0_49] : memref<6x72x16xf32, #tpu.memory_space<vmem>>, vector<1x64x16xf32>
    %50 = vector.shape_cast %49 : vector<1x64x16xf32> to vector<64x16xf32>
    %c8_50 = arith.constant 8 : index
    %c0_51 = arith.constant 0 : index
    %c0_52 = arith.constant 0 : index
    %51 = vector.load %arg2[%c8_50, %c0_51, %c0_52] : memref<9x16x32xf32, #tpu.memory_space<vmem>>, vector<1x16x32xf32>
    %52 = vector.shape_cast %51 : vector<1x16x32xf32> to vector<16x32xf32>
    %cst_53 = arith.constant dense<0.000000e+00> : vector<64x32xf32>
    %53 = tpu.matmul %50, %52, %cst_53 {dimension_numbers = #tpu.dot_dimension_numbers<[1], [0], [0], [1], [0, 0, 1, 1], [], []>} : vector<64x16xf32>, vector<16x32xf32>, vector<64x32xf32> -> vector<64x32xf32>
    %54 = arith.addf %48, %53 : vector<64x32xf32>
    %c0_54 = arith.constant 0 : index
    %c0_55 = arith.constant 0 : index
    %c0_56 = arith.constant 0 : index
    %55 = vector.load %arg3[%c0_54, %c0_55, %c0_56] : memref<1x64x32xf32, #tpu.memory_space<vmem>>, vector<1x64x32xf32>
    %56 = vector.shape_cast %55 : vector<1x64x32xf32> to vector<64x32xf32>
    %57 = vector.shape_cast %54 : vector<64x32xf32> to vector<1x64x32xf32>
    tpu.vector_store %arg3[%c0_54, %c0_55, %c0_56], %57 {strides = array<i32>} : memref<1x64x32xf32, #tpu.memory_space<vmem>>, vector<1x64x32xf32>,
    %cst_57 = arith.constant dense<0.000000e+00> : vector<32xf32>
    %58 = vector.multi_reduction <add>, %54, %cst_57 [0] : vector<64x32xf32> to vector<32xf32>
    %59 = vector.shape_cast %58 : vector<32xf32> to vector<1x32xf32>
    %c0_58 = arith.constant 0 : index
    %c0_59 = arith.constant 0 : index
    %c0_60 = arith.constant 0 : index
    %60 = vector.load %arg4[%c0_58, %c0_59, %c0_60] : memref<1x1x32xf32, #tpu.memory_space<vmem>>, vector<1x1x32xf32>
    %61 = vector.shape_cast %60 : vector<1x1x32xf32> to vector<1x32xf32>
    %62 = vector.shape_cast %59 : vector<1x32xf32> to vector<1x1x32xf32>
    tpu.vector_store %arg4[%c0_58, %c0_59, %c0_60], %62 {strides = array<i32>} : memref<1x1x32xf32, #tpu.memory_space<vmem>>, vector<1x1x32xf32>,
    %63 = arith.mulf %54, %54 : vector<64x32xf32>
    %cst_61 = arith.constant dense<0.000000e+00> : vector<32xf32>
    %64 = vector.multi_reduction <add>, %63, %cst_61 [0] : vector<64x32xf32> to vector<32xf32>
    %65 = vector.shape_cast %64 : vector<32xf32> to vector<1x32xf32>
    %c0_62 = arith.constant 0 : index
    %c0_63 = arith.constant 0 : index
    %c0_64 = arith.constant 0 : index
    %66 = vector.load %arg5[%c0_62, %c0_63, %c0_64] : memref<1x1x32xf32, #tpu.memory_space<vmem>>, vector<1x1x32xf32>
    %67 = vector.shape_cast %66 : vector<1x1x32xf32> to vector<1x32xf32>
    %68 = vector.shape_cast %65 : vector<1x32xf32> to vector<1x1x32xf32>
    tpu.vector_store %arg5[%c0_62, %c0_63, %c0_64], %68 {strides = array<i32>} : memref<1x1x32xf32, #tpu.memory_space<vmem>>, vector<1x1x32xf32>,
    return
  }
  func.func @transform_0(%arg0: i32) -> (i32, i32, i32) {
    %c0_i32 = arith.constant 0 : i32
    %c0_i32_0 = arith.constant 0 : i32
    %c0_i32_1 = arith.constant 0 : i32
    return %arg0, %c0_i32, %c0_i32_0 : i32, i32, i32
  }
  func.func @transform_1(%arg0: i32) -> (i32, i32, i32) {
    %c0_i32 = arith.constant 0 : i32
    %c0_i32_0 = arith.constant 0 : i32
    %c0_i32_1 = arith.constant 0 : i32
    %c0_i32_2 = arith.constant 0 : i32
    return %c0_i32, %c0_i32_0, %c0_i32_1 : i32, i32, i32
  }
  func.func @transform_2(%arg0: i32) -> (i32, i32, i32) {
    %c0_i32 = arith.constant 0 : i32
    %c0_i32_0 = arith.constant 0 : i32
    %c0_i32_1 = arith.constant 0 : i32
    return %arg0, %c0_i32, %c0_i32_0 : i32, i32, i32
  }
  func.func @transform_3(%arg0: i32) -> (i32, i32, i32) {
    %c0_i32 = arith.constant 0 : i32
    %c0_i32_0 = arith.constant 0 : i32
    %c0_i32_1 = arith.constant 0 : i32
    return %arg0, %c0_i32, %c0_i32_0 : i32, i32, i32
  }
  func.func @transform_4(%arg0: i32) -> (i32, i32, i32) {
    %c0_i32 = arith.constant 0 : i32
    %c0_i32_0 = arith.constant 0 : i32
    %c0_i32_1 = arith.constant 0 : i32
    return %arg0, %c0_i32, %c0_i32_0 : i32, i32, i32
  }
}

module attributes {stable_mosaic.version = 11 : i64} {
  func.func @_bn_act_kernel(%arg0: i32, %arg1: memref<32x128xf32, #tpu.memory_space<vmem>>, %arg2: memref<1x128xf32, #tpu.memory_space<vmem>>, %arg3: memref<1x128xf32, #tpu.memory_space<vmem>>, %arg4: memref<32x128xf32, #tpu.memory_space<vmem>>) attributes {dimension_semantics = [#tpu.dimension_semantics<parallel>], iteration_bounds = array<i64: 1>, scalar_prefetch = 0 : i64, scratch_operands = 0 : i64, tpu.core_type = #tpu.core_type<tc>, window_params = [{transform_indices = @transform_0, window_bounds = array<i64: 32, 128>}, {pipeline_mode = #tpu.pipeline_mode<synchronous>, transform_indices = @transform_1, window_bounds = array<i64: 1, 128>}, {pipeline_mode = #tpu.pipeline_mode<synchronous>, transform_indices = @transform_2, window_bounds = array<i64: 1, 128>}, {transform_indices = @transform_3, window_bounds = array<i64: 32, 128>}]} {
    %c0 = arith.constant 0 : index
    %c0_0 = arith.constant 0 : index
    %0 = vector.load %arg1[%c0, %c0_0] : memref<32x128xf32, #tpu.memory_space<vmem>>, vector<32x128xf32>
    %c0_1 = arith.constant 0 : index
    %c0_2 = arith.constant 0 : index
    %1 = vector.load %arg2[%c0_1, %c0_2] : memref<1x128xf32, #tpu.memory_space<vmem>>, vector<1x128xf32>
    %2 = vector.broadcast %1 : vector<1x128xf32> to vector<32x128xf32>
    %3 = arith.mulf %0, %2 : vector<32x128xf32>
    %c0_3 = arith.constant 0 : index
    %c0_4 = arith.constant 0 : index
    %4 = vector.load %arg3[%c0_3, %c0_4] : memref<1x128xf32, #tpu.memory_space<vmem>>, vector<1x128xf32>
    %5 = vector.broadcast %4 : vector<1x128xf32> to vector<32x128xf32>
    %6 = arith.addf %3, %5 : vector<32x128xf32>
    %cst = arith.constant 2.000000e-01 : f32
    %7 = vector.broadcast %cst : f32 to vector<32x128xf32>
    %8 = arith.mulf %7, %6 : vector<32x128xf32>
    %9 = arith.maximumf %6, %8 : vector<32x128xf32>
    %c0_5 = arith.constant 0 : index
    %c0_6 = arith.constant 0 : index
    %10 = vector.load %arg4[%c0_5, %c0_6] : memref<32x128xf32, #tpu.memory_space<vmem>>, vector<32x128xf32>
    tpu.vector_store %arg4[%c0_5, %c0_6], %9 {strides = array<i32>} : memref<32x128xf32, #tpu.memory_space<vmem>>, vector<32x128xf32>,
    return
  }
  func.func @transform_0(%arg0: i32) -> (i32, i32) {
    %c0_i32 = arith.constant 0 : i32
    %c0_i32_0 = arith.constant 0 : i32
    return %arg0, %c0_i32 : i32, i32
  }
  func.func @transform_1(%arg0: i32) -> (i32, i32) {
    %c0_i32 = arith.constant 0 : i32
    %c0_i32_0 = arith.constant 0 : i32
    %c0_i32_1 = arith.constant 0 : i32
    return %c0_i32, %c0_i32_0 : i32, i32
  }
  func.func @transform_2(%arg0: i32) -> (i32, i32) {
    %c0_i32 = arith.constant 0 : i32
    %c0_i32_0 = arith.constant 0 : i32
    %c0_i32_1 = arith.constant 0 : i32
    return %c0_i32, %c0_i32_0 : i32, i32
  }
  func.func @transform_3(%arg0: i32) -> (i32, i32) {
    %c0_i32 = arith.constant 0 : i32
    %c0_i32_0 = arith.constant 0 : i32
    return %arg0, %c0_i32 : i32, i32
  }
}

</mosaic_0001>

<llo_original>
// kernel: tile.18
$region0: #{tile.18}
  #allocation0 [shape = 's32[1]{0}', space=sflag, size = 0x4, scoped, tag = 'scoped memory for tile.18']
  %s0 = inlined_call_operand.vmem [shape: f32[32], index: 0, kind: input, shape index: {}]
  %s1 = inlined_call_operand.vmem [shape: f32[4,32], index: 1, kind: output, shape index: {}]
  // Predicated region
  $region2: #{tile.18} parent=0 // pred_check
    _
  $region3: #{tile.18} parent=0 // pred_check_branch
    %3 = sbr.rel (0) target = $region5
  $region4: #{tile.18} parent=0 // pred_region
    _
  $region5: #{tile.18} parent=0 // pred_fallthru
    _
  %v4 = vld [vmem:[%s0] ss:$0 sm:$0xff]
  %5 = vst [vmem:[%s1] sm:$0xf] %v4

// kernel: tile.19
$region0: #{tile.19}
  %s0 = inlined_call_operand.vmem [shape: f32[4,32], index: 0, kind: input, shape index: {}]
  %s1 = inlined_call_operand.vmem [shape: f32[1,128], index: 1, kind: output, shape index: {}]
  $region1: #{tile.19} parent=0
    #allocation0 [shape = 'u8[4096]{0}', space=vmem, size = 0x1000, scoped, tag = 'scoped mem for output reshape']
    #allocation1 [shape = 'u8[4096]{0}', space=vmem, size = 0x1000, scoped, tag = 'scoped mem for input reshape']
    %s3 = sshllo.u32 0, 4
    %v4 = vld [vmem:[%s0] sm:%s3]
    %5 = vst [vmem:[#allocation1] sm:%s3] %v4
    %v6 = vld [vmem:[#allocation1] sm:$0x1]
    %vm7 = vcmask 261120
    %8 = vst.msk [vmem:[#allocation0] sm:$0x1] %vm7, %v6
    %s9 = scalar_lea.vmem [#allocation1], 3
    %v10 = vld [vmem:[%s9] sm:$0x1]
    %11 = vrot.lane.b32.xlu0 %v10, 96
    %v12 = vpop.permute.xlu0 %11
    %vm13 = vcmask 1048320
    %14 = vst.msk [vmem:[#allocation0] sm:$0x1] %vm13, %v12
    %s15 = scalar_lea.vmem [#allocation1], 2
    %v16 = vld [vmem:[%s15] sm:$0x1]
    %17 = vrot.lane.b32.xlu0 %v16, 64
    %v18 = vpop.permute.xlu0 %17
    %vm19 = vcmask 785920
    %20 = vst.msk [vmem:[#allocation0] sm:$0x1] %vm19, %v18
    %s21 = scalar_lea.vmem [#allocation1], 1
    %v22 = vld [vmem:[%s21] sm:$0x1]
    %23 = vrot.lane.b32.xlu0 %v22, 32
    %v24 = vpop.permute.xlu0 %23
    %vm25 = vcmask 523520
    %26 = vst.msk [vmem:[#allocation0] sm:$0x1] %vm25, %v24
    %s28 = sshllo.u32 0, 1
    %v30 = vld [vmem:[#allocation0] sm:%s28]
    %s31 = sshllo.u32 0, 1
    %32 = vst [vmem:[%s1] sm:%s31] %v30

// kernel: group2_forward.3
$region0: #{group2_forward.3}
  #allocation0 [shape = 'u32[]', space=smem, size = 0x4, offset = 0x4, fixed_abs, tag = 'smem constant byte address 0x4 - core index']
  #allocation1 [shape = 'u32[144,128]{1,0:T(1,128)}', space=vmem, size = 0x12000, scoped, tag = 'internal scratch']
  %s0 = inlined_call_operand.vmem [shape: f32[32,128], index: 0, kind: input, shape index: {}]
  %s1 = inlined_call_operand.vmem [shape: f32[1,128], index: 1, kind: input, shape index: {}]
  %s2 = inlined_call_operand.vmem [shape: f32[1,128], index: 2, kind: input, shape index: {}]
  %s3 = inlined_call_operand.vmem [shape: f32[32,128], index: 3, kind: output, shape index: {}]
  %s4 = sld [smem:[#allocation0]]
  $region22: #{group2_forward.3} parent=0
    _
  %s6 = ssub.s32 1, %s4
  %s7 = scalar_select 0, %s6, %s4
  // Predicated region
  $region2: #{group2_forward.3} parent=0 // pred_check
    _
  $region3: #{group2_forward.3} parent=0 // pred_check_branch
    %9 = sbr.rel (0) target = $region5
  $region4: #{group2_forward.3} parent=0 // pred_region
    _
  $region5: #{group2_forward.3} parent=0 // pred_fallthru
    _
  // Predicated region
  $region6: #{group2_forward.3} parent=0 // pred_check
    _
  $region7: #{group2_forward.3} parent=0 // pred_check_branch
    %11 = sbr.rel (0) target = $region9
  $region8: #{group2_forward.3} parent=0 // pred_region
    _
  $region9: #{group2_forward.3} parent=0 // pred_fallthru
    _
  // Predicated region
  $region10: #{group2_forward.3} parent=0 // pred_check
    _
  $region11: #{group2_forward.3} parent=0 // pred_check_branch
    %13 = sbr.rel (0) target = $region13
  $region12: #{group2_forward.3} parent=0 // pred_region
    _
  $region13: #{group2_forward.3} parent=0 // pred_fallthru
    _
  %v14 = vld [vmem:[%s0] sm:$0xff]
  %v15 = vld [vmem:[%s0 + $0x8] sm:$0xff]
  %v16 = vld [vmem:[%s0 + $0x10] sm:$0xff]
  %v17 = vld [vmem:[%s0 + $0x18] sm:$0xff]
  %v18 = vld [vmem:[%s1] sm:$0x1]
  %v20 = vlaneseq
  %v21 = vshrl.u32 %v20, 7
  %v22 = vsub.s32 0, %v21
  %v23 = vrot.slane %v18, %v22
  %v25 = vmul.f32 %v14, %v23
  %v26 = vmul.f32 %v15, %v23
  %v27 = vmul.f32 %v16, %v23
  %v28 = vmul.f32 %v17, %v23
  %v29 = vld [vmem:[%s2] sm:$0x1]
  %v31 = vlaneseq
  %v32 = vshrl.u32 %v31, 7
  %v33 = vsub.s32 0, %v32
  %v34 = vrot.slane %v29, %v33
  %v36 = vadd.f32 %v25, %v34
  %v37 = vadd.f32 %v26, %v34
  %v38 = vadd.f32 %v27, %v34
  %v39 = vadd.f32 %v28, %v34
  %v40 = vmul.f32 %v36, 0.2
  %v41 = vmul.f32 %v37, 0.2
  %v42 = vmul.f32 %v38, 0.2
  %v43 = vmul.f32 %v39, 0.2
  %v44 = vmax.f32 %v36, %v40
  %v45 = vmax.f32 %v37, %v41
  %v46 = vmax.f32 %v38, %v42
  %v47 = vmax.f32 %v39, %v43
  %48 = vst [vmem:[%s3] sm:$0xff] %v44
  %49 = vst [vmem:[%s3 + $0x8] sm:$0xff] %v45
  %50 = vst [vmem:[%s3 + $0x10] sm:$0xff] %v46
  %51 = vst [vmem:[%s3 + $0x18] sm:$0xff] %v47
  // Predicated region
  $region14: #{group2_forward.3} parent=0 // pred_check
    _
  $region15: #{group2_forward.3} parent=0 // pred_check_branch
    %53 = sbr.rel (0) target = $region17
  $region16: #{group2_forward.3} parent=0 // pred_region
    _
  $region17: #{group2_forward.3} parent=0 // pred_fallthru
    _
  // Predicated region
  $region18: #{group2_forward.3} parent=0 // pred_check
    _
  $region19: #{group2_forward.3} parent=0 // pred_check_branch
    %55 = sbr.rel (0) target = $region21
  $region20: #{group2_forward.3} parent=0 // pred_region
    _
  $region21: #{group2_forward.3} parent=0 // pred_fallthru
    _

// kernel: group2_forward.2
$region0: #{group2_forward.2}
  #allocation0 [shape = 'u32[]', space=smem, size = 0x4, offset = 0x4, fixed_abs, tag = 'smem constant byte address 0x4 - core index']
  #allocation1 [shape = 'u32[144,128]{1,0:T(1,128)}', space=vmem, size = 0x12000, scoped, tag = 'internal scratch']
  %s0 = inlined_call_operand.vmem [shape: f32[12,72,16], index: 0, kind: input, shape index: {}]
  %s1 = inlined_call_operand.vmem [shape: f32[9,16,32], index: 1, kind: input, shape index: {}]
  %s2 = inlined_call_operand.vmem [shape: f32[2,64,32], index: 2, kind: output, shape index: {0}]
  %s3 = inlined_call_operand.vmem [shape: f32[2,1,32], index: 3, kind: output, shape index: {1}]
  %s4 = inlined_call_operand.vmem [shape: f32[2,1,32], index: 4, kind: output, shape index: {2}]
  %5 = xla_tuple %s2, %s3, %s4
  %s6 = sld [smem:[#allocation0]]
  $region57: #{group2_forward.2} parent=0
    _
  %s8 = ssub.s32 1, %s6
  %s9 = scalar_select 0, %s8, %s6
  loop: start=0, step=1, limit=4
  $region2: #{group2_forward.2} parent=0 // loop_pre_header
    _
  $region3: #{group2_forward.2} parent=0 // loop_header
    %s11 = sphi 0, %s15
    %p12 = scmp.ge.s32.totalorder %s11, 4
    %s21 = sphi 0, %s23
    %s24 = sphi 0, %s21
    %s25 = sphi 0, %s24
    %s41 = sphi 0, %s25
    %s45 = sphi 0, %s45
    %s47 = sphi 0, %s45
    %s48 = sphi 0, %s47
    %s62 = sphi 0, %s48
    %s68 = sphi 0, %s70
    %s71 = sphi 0, %s68
    %s72 = sphi 0, %s71
    %s88 = sphi 0, %s72
    %s94 = sphi 0, %s96
    %s97 = sphi 0, %s94
    %s98 = sphi 0, %s97
    %s114 = sphi 0, %s98
    %s120 = sphi 0, %s122
    %s123 = sphi 0, %s120
    %s124 = sphi 0, %s123
    %s140 = sphi 0, %s124
  $region4: #{group2_forward.2} parent=0 // loop_header_branch
    %14 = sbr.rel (%p12) target = $region8
  $region5: #{group2_forward.2} parent=0 // loop_body
    %s16 = ssub.s32 %s11, 1
    %s17 = ssub.s32 %s11, 2
    %s18 = sadd.s32 %s11, 1
    %s19 = ssub.s32 %s11, %s18
    %p20 = scmp.eq.s32.totalorder %s19, 0
    %s22 = sadd.s32 %s21, 1
    %s23 = scalar_select %p20, %s21, %s22
    %p26 = pneg %p20
    %p27 = scmp.eq.s32.totalorder %s11, 1
    %p28 = por %p26, %p27
    %p29 = scmp.ne.s32.totalorder %s21, %s24
    %p30 = scmp.eq.s32.totalorder %s11, 0
    %p31 = por %p29, %p30
    %p32 = scmp.ne.s32.totalorder %s21, %s24
    %p33 = scmp.eq.s32.totalorder %s16, 1
    %p34 = por %p32, %p33
    %p35 = scmp.ne.s32.totalorder %s24, %s25
    %p36 = scmp.eq.s32.totalorder %s16, 0
    %p37 = por %p35, %p36
    %p38 = scmp.ne.s32.totalorder %s24, %s25
    %p39 = scmp.eq.s32.totalorder %s17, 1
    %p40 = por %p38, %p39
    %p42 = scmp.ne.s32.totalorder %s25, %s41
    %p43 = scmp.eq.s32.totalorder %s17, 0
    %p44 = por %p42, %p43
    %s46 = sadd.s32 %s45, 1
    %p49 = scmp.eq.s32.totalorder %s11, 1
    %p50 = scmp.ne.s32.totalorder %s45, %s47
    %p51 = scmp.eq.s32.totalorder %s11, 0
    %p52 = por %p50, %p51
    %p53 = scmp.ne.s32.totalorder %s45, %s47
    %p54 = scmp.eq.s32.totalorder %s16, 1
    %p55 = por %p53, %p54
    %p56 = scmp.ne.s32.totalorder %s47, %s48
    %p57 = scmp.eq.s32.totalorder %s16, 0
    %p58 = por %p56, %p57
    %p59 = scmp.ne.s32.totalorder %s47, %s48
    %p60 = scmp.eq.s32.totalorder %s17, 1
    %p61 = por %p59, %p60
    %p63 = scmp.ne.s32.totalorder %s48, %s62
    %p64 = scmp.eq.s32.totalorder %s17, 0
    %p65 = por %p63, %p64
    %s66 = ssub.s32 %s11, %s18
    %p67 = scmp.eq.s32.totalorder %s66, 0
    %s69 = sadd.s32 %s68, 1
    %s70 = scalar_select %p67, %s68, %s69
    %p73 = pneg %p67
    %p74 = scmp.eq.s32.totalorder %s11, 1
    %p75 = por %p73, %p74
    %p76 = scmp.ne.s32.totalorder %s68, %s71
    %p77 = scmp.eq.s32.totalorder %s11, 0
    %p78 = por %p76, %p77
    %p79 = scmp.ne.s32.totalorder %s68, %s71
    %p80 = scmp.eq.s32.totalorder %s16, 1
    %p81 = por %p79, %p80
    %p82 = scmp.ne.s32.totalorder %s71, %s72
    %p83 = scmp.eq.s32.totalorder %s16, 0
    %p84 = por %p82, %p83
    %p85 = scmp.ne.s32.totalorder %s71, %s72
    %p86 = scmp.eq.s32.totalorder %s17, 1
    %p87 = por %p85, %p86
    %p89 = scmp.ne.s32.totalorder %s72, %s88
    %p90 = scmp.eq.s32.totalorder %s17, 0
    %p91 = por %p89, %p90
    %s92 = ssub.s32 %s11, %s18
    %p93 = scmp.eq.s32.totalorder %s92, 0
    %s95 = sadd.s32 %s94, 1
    %s96 = scalar_select %p93, %s94, %s95
    %p99 = pneg %p93
    %p100 = scmp.eq.s32.totalorder %s11, 1
    %p101 = por %p99, %p100
    %p102 = scmp.ne.s32.totalorder %s94, %s97
    %p103 = scmp.eq.s32.totalorder %s11, 0
    %p104 = por %p102, %p103
    %p105 = scmp.ne.s32.totalorder %s94, %s97
    %p106 = scmp.eq.s32.totalorder %s16, 1
    %p107 = por %p105, %p106
    %p108 = scmp.ne.s32.totalorder %s97, %s98
    %p109 = scmp.eq.s32.totalorder %s16, 0
    %p110 = por %p108, %p109
    %p111 = scmp.ne.s32.totalorder %s97, %s98
    %p112 = scmp.eq.s32.totalorder %s17, 1
    %p113 = por %p111, %p112
    %p115 = scmp.ne.s32.totalorder %s98, %s114
    %p116 = scmp.eq.s32.totalorder %s17, 0
    %p117 = por %p115, %p116
    %s118 = ssub.s32 %s11, %s18
    %p119 = scmp.eq.s32.totalorder %s118, 0
    %s121 = sadd.s32 %s120, 1
    %s122 = scalar_select %p119, %s120, %s121
    %p125 = pneg %p119
    %p126 = scmp.eq.s32.totalorder %s11, 1
    %p127 = por %p125, %p126
    %p128 = scmp.ne.s32.totalorder %s120, %s123
    %p129 = scmp.eq.s32.totalorder %s11, 0
    %p130 = por %p128, %p129
    %p131 = scmp.ne.s32.totalorder %s120, %s123
    %p132 = scmp.eq.s32.totalorder %s16, 1
    %p133 = por %p131, %p132
    %p134 = scmp.ne.s32.totalorder %s123, %s124
    %p135 = scmp.eq.s32.totalorder %s16, 0
    %p136 = por %p134, %p135
    %p137 = scmp.ne.s32.totalorder %s123, %s124
    %p138 = scmp.eq.s32.totalorder %s17, 1
    %p139 = por %p137, %p138
    %p141 = scmp.ne.s32.totalorder %s124, %s140
    %p142 = scmp.eq.s32.totalorder %s17, 0
    %p143 = por %p141, %p142
    %p144 = scmp.le.s32.totalorder 1, %s11
    %p145 = scmp.lt.s32.totalorder %s11, 3
    %p146 = pnand %p144, %p145
    %p147 = pneg %p146
    // Predicated region
    $region9: #{group2_forward.2} parent=5 // pred_check
      _
    $region10: #{group2_forward.2} parent=5 // pred_check_branch
      %149 = sbr.rel (%p146) target = $region12
    $region11: #{group2_forward.2} parent=5 // pred_region
      %s150 = ssub.s32 %s11, 1
      // Predicated region
      $region13: #{group2_forward.2} parent=11 // pred_check
        %p151 = pneg %p58
      $region14: #{group2_forward.2} parent=11 // pred_check_branch
        %153 = sbr.rel (%p151) target = $region16
      $region15: #{group2_forward.2} parent=11 // pred_region
        _
      $region16: #{group2_forward.2} parent=11 // pred_fallthru
        _
    $region12: #{group2_forward.2} parent=5 // pred_fallthru
      _
    %p154 = scmp.lt.s32.totalorder %s11, 2
    // Predicated region
    $region17: #{group2_forward.2} parent=5 // pred_check
      %p155 = pneg %p154
    $region18: #{group2_forward.2} parent=5 // pred_check_branch
      %157 = sbr.rel (%p155) target = $region20
    $region19: #{group2_forward.2} parent=5 // pred_region
      // Predicated region
      $region21: #{group2_forward.2} parent=19 // pred_check
        %p158 = pneg %p31
      $region22: #{group2_forward.2} parent=19 // pred_check_branch
        %160 = sbr.rel (%p158) target = $region24
      $region23: #{group2_forward.2} parent=19 // pred_region
        %s161 = smul.u32 6, %s11
        %p162 = scmp.lt.s32.totalorder %s161, 11
        %s163 = scalar_select %p162, %s161, 11
        %s164 = smul.addr %s163, 9
        %s165 = smul.addr %s164, 8
        %s166 = scalar_lea.vmem %s0, %s165
        %s167 = smul.u32 6, %s11
      $region24: #{group2_forward.2} parent=19 // pred_fallthru
        _
    $region20: #{group2_forward.2} parent=5 // pred_fallthru
      _
    %p168 = scmp.le.s32.totalorder 1, %s11
    %p169 = scmp.lt.s32.totalorder %s11, 3
    %p170 = pnand %p168, %p169
    %p171 = pneg %p170
    // Predicated region
    $region25: #{group2_forward.2} parent=5 // pred_check
      _
    $region26: #{group2_forward.2} parent=5 // pred_check_branch
      %173 = sbr.rel (%p170) target = $region28
    $region27: #{group2_forward.2} parent=5 // pred_region
      %s174 = ssub.s32 %s11, 1
      %s175 = smul.u32 6, %s16
      %p176 = scmp.lt.s32.totalorder %s175, 11
      %s177 = scalar_select %p176, %s175, 11
      %s178 = smul.addr %s177, 9
      %s179 = smul.addr %s178, 8
      %s180 = scalar_lea.vmem %s0, %s179
      %p181 = pneg %p37
      %p182 = pneg %p34
      %p183 = pneg %p58
      %p184 = pneg %p55
      %p185 = pneg %p84
      %p186 = pneg %p81
      %p187 = scmp.lt.s32.totalorder %s16, 1
      %s188 = scalar_select %p187, %s16, 1
      %s189 = smul.addr %s188, 8
      %s190 = smul.addr %s189, 8
      %s191 = scalar_lea.vmem %s2, %s190
      %p192 = pneg %p110
      %p193 = pneg %p107
      %p194 = scmp.lt.s32.totalorder %s16, 1
      %s195 = scalar_select %p194, %s16, 1
      %s196 = scalar_lea.vmem %s3, %s195
      %p197 = pneg %p136
      %p198 = pneg %p133
      %p199 = scmp.lt.s32.totalorder %s16, 1
      %s200 = scalar_select %p199, %s16, 1
      %s201 = scalar_lea.vmem %s4, %s200
      %s202 = smul.u32 6, %s16
      %p203 = scmp.lt.s32.totalorder %s202, 11
      %s204 = scalar_select %p203, %s202, 11
      %s205 = smul.addr %s204, 9
      %s206 = smul.addr %s205, 8
      %s207 = scalar_lea.vmem %s0, %s206
      %s208 = smul.u32 6, %s16
      %p209 = scmp.lt.s32.totalorder %s16, 1
      %s210 = scalar_select %p209, %s16, 1
      %s211 = smul.addr %s210, 8
      %s212 = smul.addr %s211, 8
      %s213 = scalar_lea.vmem %s2, %s212
      %p214 = scmp.lt.s32.totalorder %s16, 1
      %s215 = scalar_select %p214, %s16, 1
      %s216 = scalar_lea.vmem %s3, %s215
      %p217 = scmp.lt.s32.totalorder %s16, 1
      %s218 = scalar_select %p217, %s16, 1
      %s219 = scalar_lea.vmem %s4, %s218
      %v220 = vld [vmem:[%s207] sm:$0xff]
      %v221 = vld [vmem:[%s207 + $0x8] sm:$0xff]
      %v222 = vld [vmem:[%s207 + $0x10] sm:$0xff]
      %v223 = vld [vmem:[%s207 + $0x18] sm:$0xff]
      %v224 = vld [vmem:[%s207 + $0x20] sm:$0xff]
      %v225 = vld [vmem:[%s207 + $0x28] sm:$0xff]
      %v226 = vld [vmem:[%s207 + $0x30] sm:$0xff]
      %v227 = vld [vmem:[%s207 + $0x38] sm:$0xff]
      %v228 = vld [vmem:[%s1] sm:$0xff]
      %v229 = vld [vmem:[%s1 + $0x8] sm:$0xff]
      %s230 = scalar_lea.vmem %s207, 72
      %v231 = vld [vmem:[%s230] sm:$0xff]
      %v232 = vld [vmem:[%s230 + $0x8] sm:$0xff]
      %v233 = vld [vmem:[%s230 + $0x10] sm:$0xff]
      %v234 = vld [vmem:[%s230 + $0x18] sm:$0xff]
      %v235 = vld [vmem:[%s230 + $0x20] sm:$0xff]
      %v236 = vld [vmem:[%s230 + $0x28] sm:$0xff]
      %v237 = vld [vmem:[%s230 + $0x30] sm:$0xff]
      %v238 = vld [vmem:[%s230 + $0x38] sm:$0xff]
      %s239 = scalar_lea.vmem %s1, 16
      %v240 = vld [vmem:[%s239] sm:$0xff]
      %v241 = vld [vmem:[%s239 + $0x8] sm:$0xff]
      %vm242 = vcmask 130048
      %v244 = vsel %vm242, %v231, 0
      %v247 = vsel %vm242, %v232, 0
      %v250 = vsel %vm242, %v233, 0
      %v253 = vsel %vm242, %v234, 0
      %v256 = vsel %vm242, %v235, 0
      %v259 = vsel %vm242, %v236, 0
      %v262 = vsel %vm242, %v237, 0
      %v265 = vsel %vm242, %v238, 0
      %267 = vmatprep.subr.mxu0 0.0
      %268 = vmatpush1.msra.mxu0 %v240
      %269 = vmatprep.subr.mxu0 0.0
      %270 = vmatpush1.msra.mxu0 %v241
      %271 = vmatprep.subr.mxu0 0.0
      %272 = vmatpush1.msra.mxu0 0.0
      %273 = vmatprep.subr.mxu0 0.0
      %274 = vmatpush1.msra.mxu0 0.0
      %275 = vmatprep.subr.mxu0 0.0
      %276 = vmatpush1.msra.mxu0 0.0
      %277 = vmatprep.subr.mxu0 0.0
      %278 = vmatpush1.msra.mxu0 0.0
      %279 = vmatprep.subr.mxu0 0.0
      %280 = vmatpush1.msra.mxu0 0.0
      %281 = vmatprep.subr.mxu0 0.0
      %282 = vmatpush1.msra.mxu0 0.0
      %283 = vmatprep.subr.mxu0 0.0
      %284 = vmatpush1.msra.mxu0 0.0
      %285 = vmatprep.subr.mxu0 0.0
      %286 = vmatpush1.msra.mxu0 0.0
      %287 = vmatprep.subr.mxu0 0.0
      %288 = vmatpush1.msra.mxu0 0.0
      %289 = vmatprep.subr.mxu0 0.0
      %290 = vmatpush1.msra.mxu0 0.0
      %291 = vmatprep.subr.mxu0 0.0
      %292 = vmatpush1.msra.mxu0 0.0
      %293 = vmatprep.subr.mxu0 0.0
      %294 = vmatpush1.msra.mxu0 0.0
      %295 = vmatprep.subr.mxu0 0.0
      %296 = vmatpush1.msra.mxu0 0.0
      %297 = vmatprep.subr.mxu0 0.0
      %298 = vmatpush1.msra.mxu0 0.0
      %299 = vmatprep.subr.mxu0 0.0
      %300 = vmatpush1.msra.mxu0 0.0
      %301 = vmatprep.subr.mxu0 0.0
      %302 = vmatpush1.msra.mxu0 0.0
      %303 = vmatprep.subr.mxu0 0.0
      %304 = vmatpush1.msra.mxu0 0.0
      %305 = vmatprep.subr.mxu0 0.0
      %306 = vmatpush1.msra.mxu0 0.0
      %307 = vmatprep.subr.mxu0 0.0
      %308 = vmatpush1.msra.mxu0 0.0
      %309 = vmatprep.subr.mxu0 0.0
      %310 = vmatpush1.msra.mxu0 0.0
      %311 = vmatprep.subr.mxu0 0.0
      %312 = vmatpush1.msra.mxu0 0.0
      %313 = vmatprep.subr.mxu0 0.0
      %314 = vmatpush1.msra.mxu0 0.0
      %315 = vmatprep.subr.mxu0 0.0
      %316 = vmatpush1.msra.mxu0 0.0
      %317 = vmatprep.subr.mxu0 0.0
      %318 = vmatpush1.msra.mxu0 0.0
      %319 = vmatprep.subr.mxu0 0.0
      %320 = vmatpush1.msra.mxu0 0.0
      %321 = vmatprep.subr.mxu0 0.0
      %322 = vmatpush1.msra.mxu0 0.0
      %323 = vmatprep.subr.mxu0 0.0
      %324 = vmatpush1.msra.mxu0 0.0
      %325 = vmatprep.subr.mxu0 0.0
      %326 = vmatpush1.msra.mxu0 0.0
      %327 = vmatprep.subr.mxu0 0.0
      %328 = vmatpush1.msra.mxu0 0.0
      %329 = vmatprep.subr.mxu0 0.0
      %330 = vmatpush1.msra.mxu0 0.0
      %331 = vmatprep.mubr.f32.mxu0 0.0
      %332 = vmatmul.mubr.f32.gmra.mrb[0].mxu0 %v244
      %v333 = vpop.f32.mrb[0].mxu0
      %v334 = vadd.f32 0.0, %v333
      %v335 = vpop.f32.mrb[0].mxu0
      %336 = vmatprep.mubr.f32.mxu0 0.0
      %337 = vmatmul.mubr.f32.gmra.mrb[0].mxu0 %v247
      %v338 = vpop.f32.mrb[0].mxu0
      %v339 = vadd.f32 0.0, %v338
      %v340 = vpop.f32.mrb[0].mxu0
      %341 = vmatprep.mubr.f32.mxu0 0.0
      %342 = vmatmul.mubr.f32.gmra.mrb[0].mxu0 %v250
      %v343 = vpop.f32.mrb[0].mxu0
      %v344 = vadd.f32 0.0, %v343
      %v345 = vpop.f32.mrb[0].mxu0
      %346 = vmatprep.mubr.f32.mxu0 0.0
      %347 = vmatmul.mubr.f32.gmra.mrb[0].mxu0 %v253
      %v348 = vpop.f32.mrb[0].mxu0
      %v349 = vadd.f32 0.0, %v348
      %v350 = vpop.f32.mrb[0].mxu0
      %351 = vmatprep.mubr.f32.mxu0 0.0
      %352 = vmatmul.mubr.f32.gmra.mrb[0].mxu0 %v256
      %v353 = vpop.f32.mrb[0].mxu0
      %v354 = vadd.f32 0.0, %v353
      %v355 = vpop.f32.mrb[0].mxu0
      %356 = vmatprep.mubr.f32.mxu0 0.0
      %357 = vmatmul.mubr.f32.gmra.mrb[0].mxu0 %v259
      %v358 = vpop.f32.mrb[0].mxu0
      %v359 = vadd.f32 0.0, %v358
      %v360 = vpop.f32.mrb[0].mxu0
      %361 = vmatprep.mubr.f32.mxu0 0.0
      %362 = vmatmul.mubr.f32.gmra.mrb[0].mxu0 %v262
      %v363 = vpop.f32.mrb[0].mxu0
      %v364 = vadd.f32 0.0, %v363
      %v365 = vpop.f32.mrb[0].mxu0
      %366 = vmatprep.mubr.f32.mxu0 0.0
      %367 = vmatmul.mubr.f32.gmra.mrb[0].mxu0 %v265
      %v368 = vpop.f32.mrb[0].mxu0
      %v369 = vadd.f32 0.0, %v368
      %v370 = vpop.f32.mrb[0].mxu0
      %371 = vdwg.mxu0
      %v373 = vsel %vm242, %v220, 0
      %v376 = vsel %vm242, %v221, 0
      %v379 = vsel %vm242, %v222, 0
      %v382 = vsel %vm242, %v223, 0
      %v385 = vsel %vm242, %v224, 0
      %v388 = vsel %vm242, %v225, 0
      %v391 = vsel %vm242, %v226, 0
      %v394 = vsel %vm242, %v227, 0
      %396 = vmatprep.subr.mxu0 0.0
      %397 = vmatpush1.msra.mxu0 %v228
      %398 = vmatprep.subr.mxu0 0.0
      %399 = vmatpush1.msra.mxu0 %v229
      %400 = vmatprep.subr.mxu0 0.0
      %401 = vmatpush1.msra.mxu0 0.0
      %402 = vmatprep.subr.mxu0 0.0
      %403 = vmatpush1.msra.mxu0 0.0
      %404 = vmatprep.subr.mxu0 0.0
      %405 = vmatpush1.msra.mxu0 0.0
      %406 = vmatprep.subr.mxu0 0.0
      %407 = vmatpush1.msra.mxu0 0.0
      %408 = vmatprep.subr.mxu0 0.0
      %409 = vmatpush1.msra.mxu0 0.0
      %410 = vmatprep.subr.mxu0 0.0
      %411 = vmatpush1.msra.mxu0 0.0
      %412 = vmatprep.subr.mxu0 0.0
      %413 = vmatpush1.msra.mxu0 0.0
      %414 = vmatprep.subr.mxu0 0.0
      %415 = vmatpush1.msra.mxu0 0.0
      %416 = vmatprep.subr.mxu0 0.0
      %417 = vmatpush1.msra.mxu0 0.0
      %418 = vmatprep.subr.mxu0 0.0
      %419 = vmatpush1.msra.mxu0 0.0
      %420 = vmatprep.subr.mxu0 0.0
      %421 = vmatpush1.msra.mxu0 0.0
      %422 = vmatprep.subr.mxu0 0.0
      %423 = vmatpush1.msra.mxu0 0.0
      %424 = vmatprep.subr.mxu0 0.0
      %425 = vmatpush1.msra.mxu0 0.0
      %426 = vmatprep.subr.mxu0 0.0
      %427 = vmatpush1.msra.mxu0 0.0
      %428 = vmatprep.subr.mxu0 0.0
      %429 = vmatpush1.msra.mxu0 0.0
      %430 = vmatprep.subr.mxu0 0.0
      %431 = vmatpush1.msra.mxu0 0.0
      %432 = vmatprep.subr.mxu0 0.0
      %433 = vmatpush1.msra.mxu0 0.0
      %434 = vmatprep.subr.mxu0 0.0
      %435 = vmatpush1.msra.mxu0 0.0
      %436 = vmatprep.subr.mxu0 0.0
      %437 = vmatpush1.msra.mxu0 0.0
      %438 = vmatprep.subr.mxu0 0.0
      %439 = vmatpush1.msra.mxu0 0.0
      %440 = vmatprep.subr.mxu0 0.0
      %441 = vmatpush1.msra.mxu0 0.0
      %442 = vmatprep.subr.mxu0 0.0
      %443 = vmatpush1.msra.mxu0 0.0
      %444 = vmatprep.subr.mxu0 0.0
      %445 = vmatpush1.msra.mxu0 0.0
      %446 = vmatprep.subr.mxu0 0.0
      %447 = vmatpush1.msra.mxu0 0.0
      %448 = vmatprep.subr.mxu0 0.0
      %449 = vmatpush1.msra.mxu0 0.0
      %450 = vmatprep.subr.mxu0 0.0
      %451 = vmatpush1.msra.mxu0 0.0
      %452 = vmatprep.subr.mxu0 0.0
      %453 = vmatpush1.msra.mxu0 0.0
      %454 = vmatprep.subr.mxu0 0.0
      %455 = vmatpush1.msra.mxu0 0.0
      %456 = vmatprep.subr.mxu0 0.0
      %457 = vmatpush1.msra.mxu0 0.0
      %458 = vmatprep.subr.mxu0 0.0
      %459 = vmatpush1.msra.mxu0 0.0
      %460 = vmatprep.mubr.f32.mxu0 0.0
      %461 = vmatmul.mubr.f32.gmra.mrb[0].mxu0 %v373
      %v462 = vpop.f32.mrb[0].mxu0
      %v463 = vadd.f32 %v334, %v462
      %v464 = vpop.f32.mrb[0].mxu0
      %465 = vmatprep.mubr.f32.mxu0 0.0
      %466 = vmatmul.mubr.f32.gmra.mrb[0].mxu0 %v376
      %v467 = vpop.f32.mrb[0].mxu0
      %v468 = vadd.f32 %v339, %v467
      %v469 = vpop.f32.mrb[0].mxu0
      %470 = vmatprep.mubr.f32.mxu0 0.0
      %471 = vmatmul.mubr.f32.gmra.mrb[0].mxu0 %v379
      %v472 = vpop.f32.mrb[0].mxu0
      %v473 = vadd.f32 %v344, %v472
      %v474 = vpop.f32.mrb[0].mxu0
      %475 = vmatprep.mubr.f32.mxu0 0.0
      %476 = vmatmul.mubr.f32.gmra.mrb[0].mxu0 %v382
      %v477 = vpop.f32.mrb[0].mxu0
      %v478 = vadd.f32 %v349, %v477
      %v479 = vpop.f32.mrb[0].mxu0
      %480 = vmatprep.mubr.f32.mxu0 0.0
      %481 = vmatmul.mubr.f32.gmra.mrb[0].mxu0 %v385
      %v482 = vpop.f32.mrb[0].mxu0
      %v483 = vadd.f32 %v354, %v482
      %v484 = vpop.f32.mrb[0].mxu0
      %485 = vmatprep.mubr.f32.mxu0 0.0
      %486 = vmatmul.mubr.f32.gmra.mrb[0].mxu0 %v388
      %v487 = vpop.f32.mrb[0].mxu0
      %v488 = vadd.f32 %v359, %v487
      %v489 = vpop.f32.mrb[0].mxu0
      %490 = vmatprep.mubr.f32.mxu0 0.0
      %491 = vmatmul.mubr.f32.gmra.mrb[0].mxu0 %v391
      %v492 = vpop.f32.mrb[0].mxu0
      %v493 = vadd.f32 %v364, %v492
      %v494 = vpop.f32.mrb[0].mxu0
      %495 = vmatprep.mubr.f32.mxu0 0.0
      %496 = vmatmul.mubr.f32.gmra.mrb[0].mxu0 %v394
      %v497 = vpop.f32.mrb[0].mxu0
      %v498 = vadd.f32 %v369, %v497
      %v499 = vpop.f32.mrb[0].mxu0
      %500 = vdwg.mxu0
      %s501 = scalar_lea.vmem %s207, 144
      %v502 = vld [vmem:[%s501] sm:$0xff]
      %v503 = vld [vmem:[%s501 + $0x8] sm:$0xff]
      %v504 = vld [vmem:[%s501 + $0x10] sm:$0xff]
      %v505 = vld [vmem:[%s501 + $0x18] sm:$0xff]
      %v506 = vld [vmem:[%s501 + $0x20] sm:$0xff]
      %v507 = vld [vmem:[%s501 + $0x28] sm:$0xff]
      %v508 = vld [vmem:[%s501 + $0x30] sm:$0xff]
      %v509 = vld [vmem:[%s501 + $0x38] sm:$0xff]
      %s510 = scalar_lea.vmem %s1, 32
      %v511 = vld [vmem:[%s510] sm:$0xff]
      %v512 = vld [vmem:[%s510 + $0x8] sm:$0xff]
      %v514 = vsel %vm242, %v502, 0
      %v517 = vsel %vm242, %v503, 0
      %v520 = vsel %vm242, %v504, 0
      %v523 = vsel %vm242, %v505, 0
      %v526 = vsel %vm242, %v506, 0
      %v529 = vsel %vm242, %v507, 0
      %v532 = vsel %vm242, %v508, 0
      %v535 = vsel %vm242, %v509, 0
      %537 = vmatprep.subr.mxu0 0.0
      %538 = vmatpush1.msra.mxu0 %v511
      %539 = vmatprep.subr.mxu0 0.0
      %540 = vmatpush1.msra.mxu0 %v512
      %541 = vmatprep.subr.mxu0 0.0
      %542 = vmatpush1.msra.mxu0 0.0
      %543 = vmatprep.subr.mxu0 0.0
      %544 = vmatpush1.msra.mxu0 0.0
      %545 = vmatprep.subr.mxu0 0.0
      %546 = vmatpush1.msra.mxu0 0.0
      %547 = vmatprep.subr.mxu0 0.0
      %548 = vmatpush1.msra.mxu0 0.0
      %549 = vmatprep.subr.mxu0 0.0
      %550 = vmatpush1.msra.mxu0 0.0
      %551 = vmatprep.subr.mxu0 0.0
      %552 = vmatpush1.msra.mxu0 0.0
      %553 = vmatprep.subr.mxu0 0.0
      %554 = vmatpush1.msra.mxu0 0.0
      %555 = vmatprep.subr.mxu0 0.0
      %556 = vmatpush1.msra.mxu0 0.0
      %557 = vmatprep.subr.mxu0 0.0
      %558 = vmatpush1.msra.mxu0 0.0
      %559 = vmatprep.subr.mxu0 0.0
      %560 = vmatpush1.msra.mxu0 0.0
      %561 = vmatprep.subr.mxu0 0.0
      %562 = vmatpush1.msra.mxu0 0.0
      %563 = vmatprep.subr.mxu0 0.0
      %564 = vmatpush1.msra.mxu0 0.0
      %565 = vmatprep.subr.mxu0 0.0
      %566 = vmatpush1.msra.mxu0 0.0
      %567 = vmatprep.subr.mxu0 0.0
      %568 = vmatpush1.msra.mxu0 0.0
      %569 = vmatprep.subr.mxu0 0.0
      %570 = vmatpush1.msra.mxu0 0.0
      %571 = vmatprep.subr.mxu0 0.0
      %572 = vmatpush1.msra.mxu0 0.0
      %573 = vmatprep.subr.mxu0 0.0
      %574 = vmatpush1.msra.mxu0 0.0
      %575 = vmatprep.subr.mxu0 0.0
      %576 = vmatpush1.msra.mxu0 0.0
      %577 = vmatprep.subr.mxu0 0.0
      %578 = vmatpush1.msra.mxu0 0.0
      %579 = vmatprep.subr.mxu0 0.0
      %580 = vmatpush1.msra.mxu0 0.0
      %581 = vmatprep.subr.mxu0 0.0
      %582 = vmatpush1.msra.mxu0 0.0
      %583 = vmatprep.subr.mxu0 0.0
      %584 = vmatpush1.msra.mxu0 0.0
      %585 = vmatprep.subr.mxu0 0.0
      %586 = vmatpush1.msra.mxu0 0.0
      %587 = vmatprep.subr.mxu0 0.0
      %588 = vmatpush1.msra.mxu0 0.0
      %589 = vmatprep.subr.mxu0 0.0
      %590 = vmatpush1.msra.mxu0 0.0
      %591 = vmatprep.subr.mxu0 0.0
      %592 = vmatpush1.msra.mxu0 0.0
      %593 = vmatprep.subr.mxu0 0.0
      %594 = vmatpush1.msra.mxu0 0.0
      %595 = vmatprep.subr.mxu0 0.0
      %596 = vmatpush1.msra.mxu0 0.0
      %597 = vmatprep.subr.mxu0 0.0
      %598 = vmatpush1.msra.mxu0 0.0
      %599 = vmatprep.subr.mxu0 0.0
      %600 = vmatpush1.msra.mxu0 0.0
      %601 = vmatprep.mubr.f32.mxu0 0.0
      %602 = vmatmul.mubr.f32.gmra.mrb[0].mxu0 %v514
      %v603 = vpop.f32.mrb[0].mxu0
      %v604 = vadd.f32 0.0, %v603
      %v605 = vpop.f32.mrb[0].mxu0
      %606 = vmatprep.mubr.f32.mxu0 0.0
      %607 = vmatmul.mubr.f32.gmra.mrb[0].mxu0 %v517
      %v608 = vpop.f32.mrb[0].mxu0
      %v609 = vadd.f32 0.0, %v608
      %v610 = vpop.f32.mrb[0].mxu0
      %611 = vmatprep.mubr.f32.mxu0 0.0
      %612 = vmatmul.mubr.f32.gmra.mrb[0].mxu0 %v520
      %v613 = vpop.f32.mrb[0].mxu0
      %v614 = vadd.f32 0.0, %v613
      %v615 = vpop.f32.mrb[0].mxu0
      %616 = vmatprep.mubr.f32.mxu0 0.0
      %617 = vmatmul.mubr.f32.gmra.mrb[0].mxu0 %v523
      %v618 = vpop.f32.mrb[0].mxu0
      %v619 = vadd.f32 0.0, %v618
      %v620 = vpop.f32.mrb[0].mxu0
      %621 = vmatprep.mubr.f32.mxu0 0.0
      %622 = vmatmul.mubr.f32.gmra.mrb[0].mxu0 %v526
      %v623 = vpop.f32.mrb[0].mxu0
      %v624 = vadd.f32 0.0, %v623
      %v625 = vpop.f32.mrb[0].mxu0
      %626 = vmatprep.mubr.f32.mxu0 0.0
      %627 = vmatmul.mubr.f32.gmra.mrb[0].mxu0 %v529
      %v628 = vpop.f32.mrb[0].mxu0
      %v629 = vadd.f32 0.0, %v628
      %v630 = vpop.f32.mrb[0].mxu0
      %631 = vmatprep.mubr.f32.mxu0 0.0
      %632 = vmatmul.mubr.f32.gmra.mrb[0].mxu0 %v532
      %v633 = vpop.f32.mrb[0].mxu0
      %v634 = vadd.f32 0.0, %v633
      %v635 = vpop.f32.mrb[0].mxu0
      %636 = vmatprep.mubr.f32.mxu0 0.0
      %637 = vmatmul.mubr.f32.gmra.mrb[0].mxu0 %v535
      %v638 = vpop.f32.mrb[0].mxu0
      %v639 = vadd.f32 0.0, %v638
      %v640 = vpop.f32.mrb[0].mxu0
      %641 = vdwg.mxu0
      %v642 = vadd.f32 %v463, %v604
      %v643 = vadd.f32 %v468, %v609
      %v644 = vadd.f32 %v473, %v614
      %v645 = vadd.f32 %v478, %v619
      %v646 = vadd.f32 %v483, %v624
      %v647 = vadd.f32 %v488, %v629
      %v648 = vadd.f32 %v493, %v634
      %v649 = vadd.f32 %v498, %v639
      %s650 = scalar_lea.vmem %s207, 216
      %v651 = vld [vmem:[%s650] sm:$0xff]
      %v652 = vld [vmem:[%s650 + $0x8] sm:$0xff]
      %v653 = vld [vmem:[%s650 + $0x10] sm:$0xff]
      %v654 = vld [vmem:[%s650 + $0x18] sm:$0xff]
      %v655 = vld [vmem:[%s650 + $0x20] sm:$0xff]
      %v656 = vld [vmem:[%s650 + $0x28] sm:$0xff]
      %v657 = vld [vmem:[%s650 + $0x30] sm:$0xff]
      %v658 = vld [vmem:[%s650 + $0x38] sm:$0xff]
      %s659 = scalar_lea.vmem %s1, 48
      %v660 = vld [vmem:[%s659] sm:$0xff]
      %v661 = vld [vmem:[%s659 + $0x8] sm:$0xff]
      %v663 = vsel %vm242, %v651, 0
      %v666 = vsel %vm242, %v652, 0
      %v669 = vsel %vm242, %v653, 0
      %v672 = vsel %vm242, %v654, 0
      %v675 = vsel %vm242, %v655, 0
      %v678 = vsel %vm242, %v656, 0
      %v681 = vsel %vm242, %v657, 0
      %v684 = vsel %vm242, %v658, 0
      %686 = vmatprep.subr.mxu0 0.0
      %687 = vmatpush1.msra.mxu0 %v660
      %688 = vmatprep.subr.mxu0 0.0
      %689 = vmatpush1.msra.mxu0 %v661
      %690 = vmatprep.subr.mxu0 0.0
      %691 = vmatpush1.msra.mxu0 0.0
      %692 = vmatprep.subr.mxu0 0.0
      %693 = vmatpush1.msra.mxu0 0.0
      %694 = vmatprep.subr.mxu0 0.0
      %695 = vmatpush1.msra.mxu0 0.0
      %696 = vmatprep.subr.mxu0 0.0
      %697 = vmatpush1.msra.mxu0 0.0
      %698 = vmatprep.subr.mxu0 0.0
      %699 = vmatpush1.msra.mxu0 0.0
      %700 = vmatprep.subr.mxu0 0.0
      %701 = vmatpush1.msra.mxu0 0.0
      %702 = vmatprep.subr.mxu0 0.0
      %703 = vmatpush1.msra.mxu0 0.0
      %704 = vmatprep.subr.mxu0 0.0
      %705 = vmatpush1.msra.mxu0 0.0
      %706 = vmatprep.subr.mxu0 0.0
      %707 = vmatpush1.msra.mxu0 0.0
      %708 = vmatprep.subr.mxu0 0.0
      %709 = vmatpush1.msra.mxu0 0.0
      %710 = vmatprep.subr.mxu0 0.0
      %711 = vmatpush1.msra.mxu0 0.0
      %712 = vmatprep.subr.mxu0 0.0
      %713 = vmatpush1.msra.mxu0 0.0
      %714 = vmatprep.subr.mxu0 0.0
      %715 = vmatpush1.msra.mxu0 0.0
      %716 = vmatprep.subr.mxu0 0.0
      %717 = vmatpush1.msra.mxu0 0.0
      %718 = vmatprep.subr.mxu0 0.0
      %719 = vmatpush1.msra.mxu0 0.0
      %720 = vmatprep.subr.mxu0 0.0
      %721 = vmatpush1.msra.mxu0 0.0
      %722 = vmatprep.subr.mxu0 0.0
      %723 = vmatpush1.msra.mxu0 0.0
      %724 = vmatprep.subr.mxu0 0.0
      %725 = vmatpush1.msra.mxu0 0.0
      %726 = vmatprep.subr.mxu0 0.0
      %727 = vmatpush1.msra.mxu0 0.0
      %728 = vmatprep.subr.mxu0 0.0
      %729 = vmatpush1.msra.mxu0 0.0
      %730 = vmatprep.subr.mxu0 0.0
      %731 = vmatpush1.msra.mxu0 0.0
      %732 = vmatprep.subr.mxu0 0.0
      %733 = vmatpush1.msra.mxu0 0.0
      %734 = vmatprep.subr.mxu0 0.0
      %735 = vmatpush1.msra.mxu0 0.0
      %736 = vmatprep.subr.mxu0 0.0
      %737 = vmatpush1.msra.mxu0 0.0
      %738 = vmatprep.subr.mxu0 0.0
      %739 = vmatpush1.msra.mxu0 0.0
      %740 = vmatprep.subr.mxu0 0.0
      %741 = vmatpush1.msra.mxu0 0.0
      %742 = vmatprep.subr.mxu0 0.0
      %743 = vmatpush1.msra.mxu0 0.0
      %744 = vmatprep.subr.mxu0 0.0
      %745 = vmatpush1.msra.mxu0 0.0
      %746 = vmatprep.subr.mxu0 0.0
      %747 = vmatpush1.msra.mxu0 0.0
      %748 = vmatprep.subr.mxu0 0.0
      %749 = vmatpush1.msra.mxu0 0.0
      %750 = vmatprep.mubr.f32.mxu0 0.0
      %751 = vmatmul.mubr.f32.gmra.mrb[0].mxu0 %v663
      %v752 = vpop.f32.mrb[0].mxu0
      %v753 = vadd.f32 0.0, %v752
      %v754 = vpop.f32.mrb[0].mxu0
      %755 = vmatprep.mubr.f32.mxu0 0.0
      %756 = vmatmul.mubr.f32.gmra.mrb[0].mxu0 %v666
      %v757 = vpop.f32.mrb[0].mxu0
      %v758 = vadd.f32 0.0, %v757
      %v759 = vpop.f32.mrb[0].mxu0
      %760 = vmatprep.mubr.f32.mxu0 0.0
      %761 = vmatmul.mubr.f32.gmra.mrb[0].mxu0 %v669
      %v762 = vpop.f32.mrb[0].mxu0
      %v763 = vadd.f32 0.0, %v762
      %v764 = vpop.f32.mrb[0].mxu0
      %765 = vmatprep.mubr.f32.mxu0 0.0
      %766 = vmatmul.mubr.f32.gmra.mrb[0].mxu0 %v672
      %v767 = vpop.f32.mrb[0].mxu0
      %v768 = vadd.f32 0.0, %v767
      %v769 = vpop.f32.mrb[0].mxu0
      %770 = vmatprep.mubr.f32.mxu0 0.0
      %771 = vmatmul.mubr.f32.gmra.mrb[0].mxu0 %v675
      %v772 = vpop.f32.mrb[0].mxu0
      %v773 = vadd.f32 0.0, %v772
      %v774 = vpop.f32.mrb[0].mxu0
      %775 = vmatprep.mubr.f32.mxu0 0.0
      %776 = vmatmul.mubr.f32.gmra.mrb[0].mxu0 %v678
      %v777 = vpop.f32.mrb[0].mxu0
      %v778 = vadd.f32 0.0, %v777
      %v779 = vpop.f32.mrb[0].mxu0
      %780 = vmatprep.mubr.f32.mxu0 0.0
      %781 = vmatmul.mubr.f32.gmra.mrb[0].mxu0 %v681
      %v782 = vpop.f32.mrb[0].mxu0
      %v783 = vadd.f32 0.0, %v782
      %v784 = vpop.f32.mrb[0].mxu0
      %785 = vmatprep.mubr.f32.mxu0 0.0
      %786 = vmatmul.mubr.f32.gmra.mrb[0].mxu0 %v684
      %v787 = vpop.f32.mrb[0].mxu0
      %v788 = vadd.f32 0.0, %v787
      %v789 = vpop.f32.mrb[0].mxu0
      %790 = vdwg.mxu0
      %v791 = vadd.f32 %v642, %v753
      %v792 = vadd.f32 %v643, %v758
      %v793 = vadd.f32 %v644, %v763
      %v794 = vadd.f32 %v645, %v768
      %v795 = vadd.f32 %v646, %v773
      %v796 = vadd.f32 %v647, %v778
      %v797 = vadd.f32 %v648, %v783
      %v798 = vadd.f32 %v649, %v788
      %s799 = scalar_lea.vmem %s207, 288
      %v800 = vld [vmem:[%s799] sm:$0xff]
      %v801 = vld [vmem:[%s799 + $0x8] sm:$0xff]
      %v802 = vld [vmem:[%s799 + $0x10] sm:$0xff]
      %v803 = vld [vmem:[%s799 + $0x18] sm:$0xff]
      %v804 = vld [vmem:[%s799 + $0x20] sm:$0xff]
      %v805 = vld [vmem:[%s799 + $0x28] sm:$0xff]
      %v806 = vld [vmem:[%s799 + $0x30] sm:$0xff]
      %v807 = vld [vmem:[%s799 + $0x38] sm:$0xff]
      %s808 = scalar_lea.vmem %s1, 64
      %v809 = vld [vmem:[%s808] sm:$0xff]
      %v810 = vld [vmem:[%s808 + $0x8] sm:$0xff]
      %v812 = vsel %vm242, %v800, 0
      %v815 = vsel %vm242, %v801, 0
      %v818 = vsel %vm242, %v802, 0
      %v821 = vsel %vm242, %v803, 0
      %v824 = vsel %vm242, %v804, 0
      %v827 = vsel %vm242, %v805, 0
      %v830 = vsel %vm242, %v806, 0
      %v833 = vsel %vm242, %v807, 0
      %835 = vmatprep.subr.mxu0 0.0
      %836 = vmatpush1.msra.mxu0 %v809
      %837 = vmatprep.subr.mxu0 0.0
      %838 = vmatpush1.msra.mxu0 %v810
      %839 = vmatprep.subr.mxu0 0.0
      %840 = vmatpush1.msra.mxu0 0.0
      %841 = vmatprep.subr.mxu0 0.0
      %842 = vmatpush1.msra.mxu0 0.0
      %843 = vmatprep.subr.mxu0 0.0
      %844 = vmatpush1.msra.mxu0 0.0
      %845 = vmatprep.subr.mxu0 0.0
      %846 = vmatpush1.msra.mxu0 0.0
      %847 = vmatprep.subr.mxu0 0.0
      %848 = vmatpush1.msra.mxu0 0.0
      %849 = vmatprep.subr.mxu0 0.0
      %850 = vmatpush1.msra.mxu0 0.0
      %851 = vmatprep.subr.mxu0 0.0
      %852 = vmatpush1.msra.mxu0 0.0
      %853 = vmatprep.subr.mxu0 0.0
      %854 = vmatpush1.msra.mxu0 0.0
      %855 = vmatprep.subr.mxu0 0.0
      %856 = vmatpush1.msra.mxu0 0.0
      %857 = vmatprep.subr.mxu0 0.0
      %858 = vmatpush1.msra.mxu0 0.0
      %859 = vmatprep.subr.mxu0 0.0
      %860 = vmatpush1.msra.mxu0 0.0
      %861 = vmatprep.subr.mxu0 0.0
      %862 = vmatpush1.msra.mxu0 0.0
      %863 = vmatprep.subr.mxu0 0.0
      %864 = vmatpush1.msra.mxu0 0.0
      %865 = vmatprep.subr.mxu0 0.0
      %866 = vmatpush1.msra.mxu0 0.0
      %867 = vmatprep.subr.mxu0 0.0
      %868 = vmatpush1.msra.mxu0 0.0
      %869 = vmatprep.subr.mxu0 0.0
      %870 = vmatpush1.msra.mxu0 0.0
      %871 = vmatprep.subr.mxu0 0.0
      %872 = vmatpush1.msra.mxu0 0.0
      %873 = vmatprep.subr.mxu0 0.0
      %874 = vmatpush1.msra.mxu0 0.0
      %875 = vmatprep.subr.mxu0 0.0
      %876 = vmatpush1.msra.mxu0 0.0
      %877 = vmatprep.subr.mxu0 0.0
      %878 = vmatpush1.msra.mxu0 0.0
      %879 = vmatprep.subr.mxu0 0.0
      %880 = vmatpush1.msra.mxu0 0.0
      %881 = vmatprep.subr.mxu0 0.0
      %882 = vmatpush1.msra.mxu0 0.0
      %883 = vmatprep.subr.mxu0 0.0
      %884 = vmatpush1.msra.mxu0 0.0
      %885 = vmatprep.subr.mxu0 0.0
      %886 = vmatpush1.msra.mxu0 0.0
      %887 = vmatprep.subr.mxu0 0.0
      %888 = vmatpush1.msra.mxu0 0.0
      %889 = vmatprep.subr.mxu0 0.0
      %890 = vmatpush1.msra.mxu0 0.0
      %891 = vmatprep.subr.mxu0 0.0
      %892 = vmatpush1.msra.mxu0 0.0
      %893 = vmatprep.subr.mxu0 0.0
      %894 = vmatpush1.msra.mxu0 0.0
      %895 = vmatprep.subr.mxu0 0.0
      %896 = vmatpush1.msra.mxu0 0.0
      %897 = vmatprep.subr.mxu0 0.0
      %898 = vmatpush1.msra.mxu0 0.0
      %899 = vmatprep.mubr.f32.mxu0 0.0
      %900 = vmatmul.mubr.f32.gmra.mrb[0].mxu0 %v812
      %v901 = vpop.f32.mrb[0].mxu0
      %v902 = vadd.f32 0.0, %v901
      %v903 = vpop.f32.mrb[0].mxu0
      %904 = vmatprep.mubr.f32.mxu0 0.0
      %905 = vmatmul.mubr.f32.gmra.mrb[0].mxu0 %v815
      %v906 = vpop.f32.mrb[0].mxu0
      %v907 = vadd.f32 0.0, %v906
      %v908 = vpop.f32.mrb[0].mxu0
      %909 = vmatprep.mubr.f32.mxu0 0.0
      %910 = vmatmul.mubr.f32.gmra.mrb[0].mxu0 %v818
      %v911 = vpop.f32.mrb[0].mxu0
      %v912 = vadd.f32 0.0, %v911
      %v913 = vpop.f32.mrb[0].mxu0
      %914 = vmatprep.mubr.f32.mxu0 0.0
      %915 = vmatmul.mubr.f32.gmra.mrb[0].mxu0 %v821
      %v916 = vpop.f32.mrb[0].mxu0
      %v917 = vadd.f32 0.0, %v916
      %v918 = vpop.f32.mrb[0].mxu0
      %919 = vmatprep.mubr.f32.mxu0 0.0
      %920 = vmatmul.mubr.f32.gmra.mrb[0].mxu0 %v824
      %v921 = vpop.f32.mrb[0].mxu0
      %v922 = vadd.f32 0.0, %v921
      %v923 = vpop.f32.mrb[0].mxu0
      %924 = vmatprep.mubr.f32.mxu0 0.0
      %925 = vmatmul.mubr.f32.gmra.mrb[0].mxu0 %v827
      %v926 = vpop.f32.mrb[0].mxu0
      %v927 = vadd.f32 0.0, %v926
      %v928 = vpop.f32.mrb[0].mxu0
      %929 = vmatprep.mubr.f32.mxu0 0.0
      %930 = vmatmul.mubr.f32.gmra.mrb[0].mxu0 %v830
      %v931 = vpop.f32.mrb[0].mxu0
      %v932 = vadd.f32 0.0, %v931
      %v933 = vpop.f32.mrb[0].mxu0
      %934 = vmatprep.mubr.f32.mxu0 0.0
      %935 = vmatmul.mubr.f32.gmra.mrb[0].mxu0 %v833
      %v936 = vpop.f32.mrb[0].mxu0
      %v937 = vadd.f32 0.0, %v936
      %v938 = vpop.f32.mrb[0].mxu0
      %939 = vdwg.mxu0
      %v940 = vadd.f32 %v791, %v902
      %v941 = vadd.f32 %v792, %v907
      %v942 = vadd.f32 %v793, %v912
      %v943 = vadd.f32 %v794, %v917
      %v944 = vadd.f32 %v795, %v922
      %v945 = vadd.f32 %v796, %v927
      %v946 = vadd.f32 %v797, %v932
      %v947 = vadd.f32 %v798, %v937
      %s948 = scalar_lea.vmem %s207, 360
      %v949 = vld [vmem:[%s948] sm:$0xff]
      %v950 = vld [vmem:[%s948 + $0x8] sm:$0xff]
      %v951 = vld [vmem:[%s948 + $0x10] sm:$0xff]
      %v952 = vld [vmem:[%s948 + $0x18] sm:$0xff]
      %v953 = vld [vmem:[%s948 + $0x20] sm:$0xff]
      %v954 = vld [vmem:[%s948 + $0x28] sm:$0xff]
      %v955 = vld [vmem:[%s948 + $0x30] sm:$0xff]
      %v956 = vld [vmem:[%s948 + $0x38] sm:$0xff]
      %s957 = scalar_lea.vmem %s1, 80
      %v958 = vld [vmem:[%s957] sm:$0xff]
      %v959 = vld [vmem:[%s957 + $0x8] sm:$0xff]
      %v961 = vsel %vm242, %v949, 0
      %v964 = vsel %vm242, %v950, 0
      %v967 = vsel %vm242, %v951, 0
      %v970 = vsel %vm242, %v952, 0
      %v973 = vsel %vm242, %v953, 0
      %v976 = vsel %vm242, %v954, 0
      %v979 = vsel %vm242, %v955, 0
      %v982 = vsel %vm242, %v956, 0
      %984 = vmatprep.subr.mxu0 0.0
      %985 = vmatpush1.msra.mxu0 %v958
      %986 = vmatprep.subr.mxu0 0.0
      %987 = vmatpush1.msra.mxu0 %v959
      %988 = vmatprep.subr.mxu0 0.0
      %989 = vmatpush1.msra.mxu0 0.0
      %990 = vmatprep.subr.mxu0 0.0
      %991 = vmatpush1.msra.mxu0 0.0
      %992 = vmatprep.subr.mxu0 0.0
      %993 = vmatpush1.msra.mxu0 0.0
      %994 = vmatprep.subr.mxu0 0.0
      %995 = vmatpush1.msra.mxu0 0.0
      %996 = vmatprep.subr.mxu0 0.0
      %997 = vmatpush1.msra.mxu0 0.0
      %998 = vmatprep.subr.mxu0 0.0
      %999 = vmatpush1.msra.mxu0 0.0
      %1000 = vmatprep.subr.mxu0 0.0
      %1001 = vmatpush1.msra.mxu0 0.0
      %1002 = vmatprep.subr.mxu0 0.0
      %1003 = vmatpush1.msra.mxu0 0.0
      %1004 = vmatprep.subr.mxu0 0.0
      %1005 = vmatpush1.msra.mxu0 0.0
      %1006 = vmatprep.subr.mxu0 0.0
      %1007 = vmatpush1.msra.mxu0 0.0
      %1008 = vmatprep.subr.mxu0 0.0
      %1009 = vmatpush1.msra.mxu0 0.0
      %1010 = vmatprep.subr.mxu0 0.0
      %1011 = vmatpush1.msra.mxu0 0.0
      %1012 = vmatprep.subr.mxu0 0.0
      %1013 = vmatpush1.msra.mxu0 0.0
      %1014 = vmatprep.subr.mxu0 0.0
      %1015 = vmatpush1.msra.mxu0 0.0
      %1016 = vmatprep.subr.mxu0 0.0
      %1017 = vmatpush1.msra.mxu0 0.0
      %1018 = vmatprep.subr.mxu0 0.0
      %1019 = vmatpush1.msra.mxu0 0.0
      %1020 = vmatprep.subr.mxu0 0.0
      %1021 = vmatpush1.msra.mxu0 0.0
      %1022 = vmatprep.subr.mxu0 0.0
      %1023 = vmatpush1.msra.mxu0 0.0
      %1024 = vmatprep.subr.mxu0 0.0
      %1025 = vmatpush1.msra.mxu0 0.0
      %1026 = vmatprep.subr.mxu0 0.0
      %1027 = vmatpush1.msra.mxu0 0.0
      %1028 = vmatprep.subr.mxu0 0.0
      %1029 = vmatpush1.msra.mxu0 0.0
      %1030 = vmatprep.subr.mxu0 0.0
      %1031 = vmatpush1.msra.mxu0 0.0
      %1032 = vmatprep.subr.mxu0 0.0
      %1033 = vmatpush1.msra.mxu0 0.0
      %1034 = vmatprep.subr.mxu0 0.0
      %1035 = vmatpush1.msra.mxu0 0.0
      %1036 = vmatprep.subr.mxu0 0.0
      %1037 = vmatpush1.msra.mxu0 0.0
      %1038 = vmatprep.subr.mxu0 0.0
      %1039 = vmatpush1.msra.mxu0 0.0
      %1040 = vmatprep.subr.mxu0 0.0
      %1041 = vmatpush1.msra.mxu0 0.0
      %1042 = vmatprep.subr.mxu0 0.0
      %1043 = vmatpush1.msra.mxu0 0.0
      %1044 = vmatprep.subr.mxu0 0.0
      %1045 = vmatpush1.msra.mxu0 0.0
      %1046 = vmatprep.subr.mxu0 0.0
      %1047 = vmatpush1.msra.mxu0 0.0
      %1048 = vmatprep.mubr.f32.mxu0 0.0
      %1049 = vmatmul.mubr.f32.gmra.mrb[0].mxu0 %v961
      %v1050 = vpop.f32.mrb[0].mxu0
      %v1051 = vadd.f32 0.0, %v1050
      %v1052 = vpop.f32.mrb[0].mxu0
      %1053 = vmatprep.mubr.f32.mxu0 0.0
      %1054 = vmatmul.mubr.f32.gmra.mrb[0].mxu0 %v964
      %v1055 = vpop.f32.mrb[0].mxu0
      %v1056 = vadd.f32 0.0, %v1055
      %v1057 = vpop.f32.mrb[0].mxu0
      %1058 = vmatprep.mubr.f32.mxu0 0.0
      %1059 = vmatmul.mubr.f32.gmra.mrb[0].mxu0 %v967
      %v1060 = vpop.f32.mrb[0].mxu0
      %v1061 = vadd.f32 0.0, %v1060
      %v1062 = vpop.f32.mrb[0].mxu0
      %1063 = vmatprep.mubr.f32.mxu0 0.0
      %1064 = vmatmul.mubr.f32.gmra.mrb[0].mxu0 %v970
      %v1065 = vpop.f32.mrb[0].mxu0
      %v1066 = vadd.f32 0.0, %v1065
      %v1067 = vpop.f32.mrb[0].mxu0
      %1068 = vmatprep.mubr.f32.mxu0 0.0
      %1069 = vmatmul.mubr.f32.gmra.mrb[0].mxu0 %v973
      %v1070 = vpop.f32.mrb[0].mxu0
      %v1071 = vadd.f32 0.0, %v1070
      %v1072 = vpop.f32.mrb[0].mxu0
      %1073 = vmatprep.mubr.f32.mxu0 0.0
      %1074 = vmatmul.mubr.f32.gmra.mrb[0].mxu0 %v976
      %v1075 = vpop.f32.mrb[0].mxu0
      %v1076 = vadd.f32 0.0, %v1075
      %v1077 = vpop.f32.mrb[0].mxu0
      %1078 = vmatprep.mubr.f32.mxu0 0.0
      %1079 = vmatmul.mubr.f32.gmra.mrb[0].mxu0 %v979
      %v1080 = vpop.f32.mrb[0].mxu0
      %v1081 = vadd.f32 0.0, %v1080
      %v1082 = vpop.f32.mrb[0].mxu0
      %1083 = vmatprep.mubr.f32.mxu0 0.0
      %1084 = vmatmul.mubr.f32.gmra.mrb[0].mxu0 %v982
      %v1085 = vpop.f32.mrb[0].mxu0
      %v1086 = vadd.f32 0.0, %v1085
      %v1087 = vpop.f32.mrb[0].mxu0
      %1088 = vdwg.mxu0
      %v1089 = vadd.f32 %v940, %v1051
      %v1090 = vadd.f32 %v941, %v1056
      %v1091 = vadd.f32 %v942, %v1061
      %v1092 = vadd.f32 %v943, %v1066
      %v1093 = vadd.f32 %v944, %v1071
      %v1094 = vadd.f32 %v945, %v1076
      %v1095 = vadd.f32 %v946, %v1081
      %v1096 = vadd.f32 %v947, %v1086
      %v1097 = vld [vmem:[%s207 + $0x8] sm:$0xff]
      %v1098 = vld [vmem:[%s207 + $0x10] sm:$0xff]
      %v1099 = vld [vmem:[%s207 + $0x18] sm:$0xff]
      %v1100 = vld [vmem:[%s207 + $0x20] sm:$0xff]
      %v1101 = vld [vmem:[%s207 + $0x28] sm:$0xff]
      %v1102 = vld [vmem:[%s207 + $0x30] sm:$0xff]
      %v1103 = vld [vmem:[%s207 + $0x38] sm:$0xff]
      %v1104 = vld [vmem:[%s207 + $0x40] sm:$0xff]
      %s1105 = scalar_lea.vmem %s1, 96
      %v1106 = vld [vmem:[%s1105] sm:$0xff]
      %v1107 = vld [vmem:[%s1105 + $0x8] sm:$0xff]
      %v1109 = vsel %vm242, %v1097, 0
      %v1112 = vsel %vm242, %v1098, 0
      %v1115 = vsel %vm242, %v1099, 0
      %v1118 = vsel %vm242, %v1100, 0
      %v1121 = vsel %vm242, %v1101, 0
      %v1124 = vsel %vm242, %v1102, 0
      %v1127 = vsel %vm242, %v1103, 0
      %v1130 = vsel %vm242, %v1104, 0
      %1132 = vmatprep.subr.mxu0 0.0
      %1133 = vmatpush1.msra.mxu0 %v1106
      %1134 = vmatprep.subr.mxu0 0.0
      %1135 = vmatpush1.msra.mxu0 %v1107
      %1136 = vmatprep.subr.mxu0 0.0
      %1137 = vmatpush1.msra.mxu0 0.0
      %1138 = vmatprep.subr.mxu0 0.0
      %1139 = vmatpush1.msra.mxu0 0.0
      %1140 = vmatprep.subr.mxu0 0.0
      %1141 = vmatpush1.msra.mxu0 0.0
      %1142 = vmatprep.subr.mxu0 0.0
      %1143 = vmatpush1.msra.mxu0 0.0
      %1144 = vmatprep.subr.mxu0 0.0
      %1145 = vmatpush1.msra.mxu0 0.0
      %1146 = vmatprep.subr.mxu0 0.0
      %1147 = vmatpush1.msra.mxu0 0.0
      %1148 = vmatprep.subr.mxu0 0.0
      %1149 = vmatpush1.msra.mxu0 0.0
      %1150 = vmatprep.subr.mxu0 0.0
      %1151 = vmatpush1.msra.mxu0 0.0
      %1152 = vmatprep.subr.mxu0 0.0
      %1153 = vmatpush1.msra.mxu0 0.0
      %1154 = vmatprep.subr.mxu0 0.0
      %1155 = vmatpush1.msra.mxu0 0.0
      %1156 = vmatprep.subr.mxu0 0.0
      %1157 = vmatpush1.msra.mxu0 0.0
      %1158 = vmatprep.subr.mxu0 0.0
      %1159 = vmatpush1.msra.mxu0 0.0
      %1160 = vmatprep.subr.mxu0 0.0
      %1161 = vmatpush1.msra.mxu0 0.0
      %1162 = vmatprep.subr.mxu0 0.0
      %1163 = vmatpush1.msra.mxu0 0.0
      %1164 = vmatprep.subr.mxu0 0.0
      %1165 = vmatpush1.msra.mxu0 0.0
      %1166 = vmatprep.subr.mxu0 0.0
      %1167 = vmatpush1.msra.mxu0 0.0
      %1168 = vmatprep.subr.mxu0 0.0
      %1169 = vmatpush1.msra.mxu0 0.0
      %1170 = vmatprep.subr.mxu0 0.0
      %1171 = vmatpush1.msra.mxu0 0.0
      %1172 = vmatprep.subr.mxu0 0.0
      %1173 = vmatpush1.msra.mxu0 0.0
      %1174 = vmatprep.subr.mxu0 0.0
      %1175 = vmatpush1.msra.mxu0 0.0
      %1176 = vmatprep.subr.mxu0 0.0
      %1177 = vmatpush1.msra.mxu0 0.0
      %1178 = vmatprep.subr.mxu0 0.0
      %1179 = vmatpush1.msra.mxu0 0.0
      %1180 = vmatprep.subr.mxu0 0.0
      %1181 = vmatpush1.msra.mxu0 0.0
      %1182 = vmatprep.subr.mxu0 0.0
      %1183 = vmatpush1.msra.mxu0 0.0
      %1184 = vmatprep.subr.mxu0 0.0
      %1185 = vmatpush1.msra.mxu0 0.0
      %1186 = vmatprep.subr.mxu0 0.0
      %1187 = vmatpush1.msra.mxu0 0.0
      %1188 = vmatprep.subr.mxu0 0.0
      %1189 = vmatpush1.msra.mxu0 0.0
      %1190 = vmatprep.subr.mxu0 0.0
      %1191 = vmatpush1.msra.mxu0 0.0
      %1192 = vmatprep.subr.mxu0 0.0
      %1193 = vmatpush1.msra.mxu0 0.0
      %1194 = vmatprep.subr.mxu0 0.0
      %1195 = vmatpush1.msra.mxu0 0.0
      %1196 = vmatprep.mubr.f32.mxu0 0.0
      %1197 = vmatmul.mubr.f32.gmra.mrb[0].mxu0 %v1109
      %v1198 = vpop.f32.mrb[0].mxu0
      %v1199 = vadd.f32 0.0, %v1198
      %v1200 = vpop.f32.mrb[0].mxu0
      %1201 = vmatprep.mubr.f32.mxu0 0.0
      %1202 = vmatmul.mubr.f32.gmra.mrb[0].mxu0 %v1112
      %v1203 = vpop.f32.mrb[0].mxu0
      %v1204 = vadd.f32 0.0, %v1203
      %v1205 = vpop.f32.mrb[0].mxu0
      %1206 = vmatprep.mubr.f32.mxu0 0.0
      %1207 = vmatmul.mubr.f32.gmra.mrb[0].mxu0 %v1115
      %v1208 = vpop.f32.mrb[0].mxu0
      %v1209 = vadd.f32 0.0, %v1208
      %v1210 = vpop.f32.mrb[0].mxu0
      %1211 = vmatprep.mubr.f32.mxu0 0.0
      %1212 = vmatmul.mubr.f32.gmra.mrb[0].mxu0 %v1118
      %v1213 = vpop.f32.mrb[0].mxu0
      %v1214 = vadd.f32 0.0, %v1213
      %v1215 = vpop.f32.mrb[0].mxu0
      %1216 = vmatprep.mubr.f32.mxu0 0.0
      %1217 = vmatmul.mubr.f32.gmra.mrb[0].mxu0 %v1121
      %v1218 = vpop.f32.mrb[0].mxu0
      %v1219 = vadd.f32 0.0, %v1218
      %v1220 = vpop.f32.mrb[0].mxu0
      %1221 = vmatprep.mubr.f32.mxu0 0.0
      %1222 = vmatmul.mubr.f32.gmra.mrb[0].mxu0 %v1124
      %v1223 = vpop.f32.mrb[0].mxu0
      %v1224 = vadd.f32 0.0, %v1223
      %v1225 = vpop.f32.mrb[0].mxu0
      %1226 = vmatprep.mubr.f32.mxu0 0.0
      %1227 = vmatmul.mubr.f32.gmra.mrb[0].mxu0 %v1127
      %v1228 = vpop.f32.mrb[0].mxu0
      %v1229 = vadd.f32 0.0, %v1228
      %v1230 = vpop.f32.mrb[0].mxu0
      %1231 = vmatprep.mubr.f32.mxu0 0.0
      %1232 = vmatmul.mubr.f32.gmra.mrb[0].mxu0 %v1130
      %v1233 = vpop.f32.mrb[0].mxu0
      %v1234 = vadd.f32 0.0, %v1233
      %v1235 = vpop.f32.mrb[0].mxu0
      %1236 = vdwg.mxu0
      %v1237 = vadd.f32 %v1089, %v1199
      %v1238 = vadd.f32 %v1090, %v1204
      %v1239 = vadd.f32 %v1091, %v1209
      %v1240 = vadd.f32 %v1092, %v1214
      %v1241 = vadd.f32 %v1093, %v1219
      %v1242 = vadd.f32 %v1094, %v1224
      %v1243 = vadd.f32 %v1095, %v1229
      %v1244 = vadd.f32 %v1096, %v1234
      %v1245 = vld [vmem:[%s230 + $0x8] sm:$0xff]
      %v1246 = vld [vmem:[%s230 + $0x10] sm:$0xff]
      %v1247 = vld [vmem:[%s230 + $0x18] sm:$0xff]
      %v1248 = vld [vmem:[%s230 + $0x20] sm:$0xff]
      %v1249 = vld [vmem:[%s230 + $0x28] sm:$0xff]
      %v1250 = vld [vmem:[%s230 + $0x30] sm:$0xff]
      %v1251 = vld [vmem:[%s230 + $0x38] sm:$0xff]
      %v1252 = vld [vmem:[%s230 + $0x40] sm:$0xff]
      %s1253 = scalar_lea.vmem %s1, 112
      %v1254 = vld [vmem:[%s1253] sm:$0xff]
      %v1255 = vld [vmem:[%s1253 + $0x8] sm:$0xff]
      %v1257 = vsel %vm242, %v1245, 0
      %v1260 = vsel %vm242, %v1246, 0
      %v1263 = vsel %vm242, %v1247, 0
      %v1266 = vsel %vm242, %v1248, 0
      %v1269 = vsel %vm242, %v1249, 0
      %v1272 = vsel %vm242, %v1250, 0
      %v1275 = vsel %vm242, %v1251, 0
      %v1278 = vsel %vm242, %v1252, 0
      %1280 = vmatprep.subr.mxu0 0.0
      %1281 = vmatpush1.msra.mxu0 %v1254
      %1282 = vmatprep.subr.mxu0 0.0
      %1283 = vmatpush1.msra.mxu0 %v1255
      %1284 = vmatprep.subr.mxu0 0.0
      %1285 = vmatpush1.msra.mxu0 0.0
      %1286 = vmatprep.subr.mxu0 0.0
      %1287 = vmatpush1.msra.mxu0 0.0
      %1288 = vmatprep.subr.mxu0 0.0
      %1289 = vmatpush1.msra.mxu0 0.0
      %1290 = vmatprep.subr.mxu0 0.0
      %1291 = vmatpush1.msra.mxu0 0.0
      %1292 = vmatprep.subr.mxu0 0.0
      %1293 = vmatpush1.msra.mxu0 0.0
      %1294 = vmatprep.subr.mxu0 0.0
      %1295 = vmatpush1.msra.mxu0 0.0
      %1296 = vmatprep.subr.mxu0 0.0
      %1297 = vmatpush1.msra.mxu0 0.0
      %1298 = vmatprep.subr.mxu0 0.0
      %1299 = vmatpush1.msra.mxu0 0.0
      %1300 = vmatprep.subr.mxu0 0.0
      %1301 = vmatpush1.msra.mxu0 0.0
      %1302 = vmatprep.subr.mxu0 0.0
      %1303 = vmatpush1.msra.mxu0 0.0
      %1304 = vmatprep.subr.mxu0 0.0
      %1305 = vmatpush1.msra.mxu0 0.0
      %1306 = vmatprep.subr.mxu0 0.0
      %1307 = vmatpush1.msra.mxu0 0.0
      %1308 = vmatprep.subr.mxu0 0.0
      %1309 = vmatpush1.msra.mxu0 0.0
      %1310 = vmatprep.subr.mxu0 0.0
      %1311 = vmatpush1.msra.mxu0 0.0
      %1312 = vmatprep.subr.mxu0 0.0
      %1313 = vmatpush1.msra.mxu0 0.0
      %1314 = vmatprep.subr.mxu0 0.0
      %1315 = vmatpush1.msra.mxu0 0.0
      %1316 = vmatprep.subr.mxu0 0.0
      %1317 = vmatpush1.msra.mxu0 0.0
      %1318 = vmatprep.subr.mxu0 0.0
      %1319 = vmatpush1.msra.mxu0 0.0
      %1320 = vmatprep.subr.mxu0 0.0
      %1321 = vmatpush1.msra.mxu0 0.0
      %1322 = vmatprep.subr.mxu0 0.0
      %1323 = vmatpush1.msra.mxu0 0.0
      %1324 = vmatprep.subr.mxu0 0.0
      %1325 = vmatpush1.msra.mxu0 0.0
      %1326 = vmatprep.subr.mxu0 0.0
      %1327 = vmatpush1.msra.mxu0 0.0
      %1328 = vmatprep.subr.mxu0 0.0
      %1329 = vmatpush1.msra.mxu0 0.0
      %1330 = vmatprep.subr.mxu0 0.0
      %1331 = vmatpush1.msra.mxu0 0.0
      %1332 = vmatprep.subr.mxu0 0.0
      %1333 = vmatpush1.msra.mxu0 0.0
      %1334 = vmatprep.subr.mxu0 0.0
      %1335 = vmatpush1.msra.mxu0 0.0
      %1336 = vmatprep.subr.mxu0 0.0
      %1337 = vmatpush1.msra.mxu0 0.0
      %1338 = vmatprep.subr.mxu0 0.0
      %1339 = vmatpush1.msra.mxu0 0.0
      %1340 = vmatprep.subr.mxu0 0.0
      %1341 = vmatpush1.msra.mxu0 0.0
      %1342 = vmatprep.subr.mxu0 0.0
      %1343 = vmatpush1.msra.mxu0 0.0
      %1344 = vmatprep.mubr.f32.mxu0 0.0
      %1345 = vmatmul.mubr.f32.gmra.mrb[0].mxu0 %v1257
      %v1346 = vpop.f32.mrb[0].mxu0
      %v1347 = vadd.f32 0.0, %v1346
      %v1348 = vpop.f32.mrb[0].mxu0
      %1349 = vmatprep.mubr.f32.mxu0 0.0
      %1350 = vmatmul.mubr.f32.gmra.mrb[0].mxu0 %v1260
      %v1351 = vpop.f32.mrb[0].mxu0
      %v1352 = vadd.f32 0.0, %v1351
      %v1353 = vpop.f32.mrb[0].mxu0
      %1354 = vmatprep.mubr.f32.mxu0 0.0
      %1355 = vmatmul.mubr.f32.gmra.mrb[0].mxu0 %v1263
      %v1356 = vpop.f32.mrb[0].mxu0
      %v1357 = vadd.f32 0.0, %v1356
      %v1358 = vpop.f32.mrb[0].mxu0
      %1359 = vmatprep.mubr.f32.mxu0 0.0
      %1360 = vmatmul.mubr.f32.gmra.mrb[0].mxu0 %v1266
      %v1361 = vpop.f32.mrb[0].mxu0
      %v1362 = vadd.f32 0.0, %v1361
      %v1363 = vpop.f32.mrb[0].mxu0
      %1364 = vmatprep.mubr.f32.mxu0 0.0
      %1365 = vmatmul.mubr.f32.gmra.mrb[0].mxu0 %v1269
      %v1366 = vpop.f32.mrb[0].mxu0
      %v1367 = vadd.f32 0.0, %v1366
      %v1368 = vpop.f32.mrb[0].mxu0
      %1369 = vmatprep.mubr.f32.mxu0 0.0
      %1370 = vmatmul.mubr.f32.gmra.mrb[0].mxu0 %v1272
      %v1371 = vpop.f32.mrb[0].mxu0
      %v1372 = vadd.f32 0.0, %v1371
      %v1373 = vpop.f32.mrb[0].mxu0
      %1374 = vmatprep.mubr.f32.mxu0 0.0
      %1375 = vmatmul.mubr.f32.gmra.mrb[0].mxu0 %v1275
      %v1376 = vpop.f32.mrb[0].mxu0
      %v1377 = vadd.f32 0.0, %v1376
      %v1378 = vpop.f32.mrb[0].mxu0
      %1379 = vmatprep.mubr.f32.mxu0 0.0
      %1380 = vmatmul.mubr.f32.gmra.mrb[0].mxu0 %v1278
      %v1381 = vpop.f32.mrb[0].mxu0
      %v1382 = vadd.f32 0.0, %v1381
      %v1383 = vpop.f32.mrb[0].mxu0
      %1384 = vdwg.mxu0
      %v1385 = vadd.f32 %v1237, %v1347
      %v1386 = vadd.f32 %v1238, %v1352
      %v1387 = vadd.f32 %v1239, %v1357
      %v1388 = vadd.f32 %v1240, %v1362
      %v1389 = vadd.f32 %v1241, %v1367
      %v1390 = vadd.f32 %v1242, %v1372
      %v1391 = vadd.f32 %v1243, %v1377
      %v1392 = vadd.f32 %v1244, %v1382
      %v1393 = vld [vmem:[%s501 + $0x8] sm:$0xff]
      %v1394 = vld [vmem:[%s501 + $0x10] sm:$0xff]
      %v1395 = vld [vmem:[%s501 + $0x18] sm:$0xff]
      %v1396 = vld [vmem:[%s501 + $0x20] sm:$0xff]
      %v1397 = vld [vmem:[%s501 + $0x28] sm:$0xff]
      %v1398 = vld [vmem:[%s501 + $0x30] sm:$0xff]
      %v1399 = vld [vmem:[%s501 + $0x38] sm:$0xff]
      %v1400 = vld [vmem:[%s501 + $0x40] sm:$0xff]
      %s1401 = scalar_lea.vmem %s1, 128
      %v1402 = vld [vmem:[%s1401] sm:$0xff]
      %v1403 = vld [vmem:[%s1401 + $0x8] sm:$0xff]
      %v1405 = vsel %vm242, %v1393, 0
      %v1408 = vsel %vm242, %v1394, 0
      %v1411 = vsel %vm242, %v1395, 0
      %v1414 = vsel %vm242, %v1396, 0
      %v1417 = vsel %vm242, %v1397, 0
      %v1420 = vsel %vm242, %v1398, 0
      %v1423 = vsel %vm242, %v1399, 0
      %v1426 = vsel %vm242, %v1400, 0
      %1428 = vmatprep.subr.mxu0 0.0
      %1429 = vmatpush1.msra.mxu0 %v1402
      %1430 = vmatprep.subr.mxu0 0.0
      %1431 = vmatpush1.msra.mxu0 %v1403
      %1432 = vmatprep.subr.mxu0 0.0
      %1433 = vmatpush1.msra.mxu0 0.0
      %1434 = vmatprep.subr.mxu0 0.0
      %1435 = vmatpush1.msra.mxu0 0.0
      %1436 = vmatprep.subr.mxu0 0.0
      %1437 = vmatpush1.msra.mxu0 0.0
      %1438 = vmatprep.subr.mxu0 0.0
      %1439 = vmatpush1.msra.mxu0 0.0
      %1440 = vmatprep.subr.mxu0 0.0
      %1441 = vmatpush1.msra.mxu0 0.0
      %1442 = vmatprep.subr.mxu0 0.0
      %1443 = vmatpush1.msra.mxu0 0.0
      %1444 = vmatprep.subr.mxu0 0.0
      %1445 = vmatpush1.msra.mxu0 0.0
      %1446 = vmatprep.subr.mxu0 0.0
      %1447 = vmatpush1.msra.mxu0 0.0
      %1448 = vmatprep.subr.mxu0 0.0
      %1449 = vmatpush1.msra.mxu0 0.0
      %1450 = vmatprep.subr.mxu0 0.0
      %1451 = vmatpush1.msra.mxu0 0.0
      %1452 = vmatprep.subr.mxu0 0.0
      %1453 = vmatpush1.msra.mxu0 0.0
      %1454 = vmatprep.subr.mxu0 0.0
      %1455 = vmatpush1.msra.mxu0 0.0
      %1456 = vmatprep.subr.mxu0 0.0
      %1457 = vmatpush1.msra.mxu0 0.0
      %1458 = vmatprep.subr.mxu0 0.0
      %1459 = vmatpush1.msra.mxu0 0.0
      %1460 = vmatprep.subr.mxu0 0.0
      %1461 = vmatpush1.msra.mxu0 0.0
      %1462 = vmatprep.subr.mxu0 0.0
      %1463 = vmatpush1.msra.mxu0 0.0
      %1464 = vmatprep.subr.mxu0 0.0
      %1465 = vmatpush1.msra.mxu0 0.0
      %1466 = vmatprep.subr.mxu0 0.0
      %1467 = vmatpush1.msra.mxu0 0.0
      %1468 = vmatprep.subr.mxu0 0.0
      %1469 = vmatpush1.msra.mxu0 0.0
      %1470 = vmatprep.subr.mxu0 0.0
      %1471 = vmatpush1.msra.mxu0 0.0
      %1472 = vmatprep.subr.mxu0 0.0
      %1473 = vmatpush1.msra.mxu0 0.0
      %1474 = vmatprep.subr.mxu0 0.0
      %1475 = vmatpush1.msra.mxu0 0.0
      %1476 = vmatprep.subr.mxu0 0.0
      %1477 = vmatpush1.msra.mxu0 0.0
      %1478 = vmatprep.subr.mxu0 0.0
      %1479 = vmatpush1.msra.mxu0 0.0
      %1480 = vmatprep.subr.mxu0 0.0
      %1481 = vmatpush1.msra.mxu0 0.0
      %1482 = vmatprep.subr.mxu0 0.0
      %1483 = vmatpush1.msra.mxu0 0.0
      %1484 = vmatprep.subr.mxu0 0.0
      %1485 = vmatpush1.msra.mxu0 0.0
      %1486 = vmatprep.subr.mxu0 0.0
      %1487 = vmatpush1.msra.mxu0 0.0
      %1488 = vmatprep.subr.mxu0 0.0
      %1489 = vmatpush1.msra.mxu0 0.0
      %1490 = vmatprep.subr.mxu0 0.0
      %1491 = vmatpush1.msra.mxu0 0.0
      %1492 = vmatprep.mubr.f32.mxu0 0.0
      %1493 = vmatmul.mubr.f32.gmra.mrb[0].mxu0 %v1405
      %v1494 = vpop.f32.mrb[0].mxu0
      %v1495 = vadd.f32 0.0, %v1494
      %v1496 = vpop.f32.mrb[0].mxu0
      %1497 = vmatprep.mubr.f32.mxu0 0.0
      %1498 = vmatmul.mubr.f32.gmra.mrb[0].mxu0 %v1408
      %v1499 = vpop.f32.mrb[0].mxu0
      %v1500 = vadd.f32 0.0, %v1499
      %v1501 = vpop.f32.mrb[0].mxu0
      %1502 = vmatprep.mubr.f32.mxu0 0.0
      %1503 = vmatmul.mubr.f32.gmra.mrb[0].mxu0 %v1411
      %v1504 = vpop.f32.mrb[0].mxu0
      %v1505 = vadd.f32 0.0, %v1504
      %v1506 = vpop.f32.mrb[0].mxu0
      %1507 = vmatprep.mubr.f32.mxu0 0.0
      %1508 = vmatmul.mubr.f32.gmra.mrb[0].mxu0 %v1414
      %v1509 = vpop.f32.mrb[0].mxu0
      %v1510 = vadd.f32 0.0, %v1509
      %v1511 = vpop.f32.mrb[0].mxu0
      %1512 = vmatprep.mubr.f32.mxu0 0.0
      %1513 = vmatmul.mubr.f32.gmra.mrb[0].mxu0 %v1417
      %v1514 = vpop.f32.mrb[0].mxu0
      %v1515 = vadd.f32 0.0, %v1514
      %v1516 = vpop.f32.mrb[0].mxu0
      %1517 = vmatprep.mubr.f32.mxu0 0.0
      %1518 = vmatmul.mubr.f32.gmra.mrb[0].mxu0 %v1420
      %v1519 = vpop.f32.mrb[0].mxu0
      %v1520 = vadd.f32 0.0, %v1519
      %v1521 = vpop.f32.mrb[0].mxu0
      %1522 = vmatprep.mubr.f32.mxu0 0.0
      %1523 = vmatmul.mubr.f32.gmra.mrb[0].mxu0 %v1423
      %v1524 = vpop.f32.mrb[0].mxu0
      %v1525 = vadd.f32 0.0, %v1524
      %v1526 = vpop.f32.mrb[0].mxu0
      %1527 = vmatprep.mubr.f32.mxu0 0.0
      %1528 = vmatmul.mubr.f32.gmra.mrb[0].mxu0 %v1426
      %v1529 = vpop.f32.mrb[0].mxu0
      %v1530 = vadd.f32 0.0, %v1529
      %v1531 = vpop.f32.mrb[0].mxu0
      %1532 = vdwg.mxu0
      %v1533 = vadd.f32 %v1385, %v1495
      %v1534 = vadd.f32 %v1386, %v1500
      %v1535 = vadd.f32 %v1387, %v1505
      %v1536 = vadd.f32 %v1388, %v1510
      %v1537 = vadd.f32 %v1389, %v1515
      %v1538 = vadd.f32 %v1390, %v1520
      %v1539 = vadd.f32 %v1391, %v1525
      %v1540 = vadd.f32 %v1392, %v1530
      %vm1541 = vcmask 261120
      %1542 = vst.msk [vmem:[%s213] sm:$0xff] %vm1541, %v1533
      %1543 = vst.msk [vmem:[%s213 + $0x8] sm:$0xff] %vm1541, %v1534
      %1544 = vst.msk [vmem:[%s213 + $0x10] sm:$0xff] %vm1541, %v1535
      %1545 = vst.msk [vmem:[%s213 + $0x18] sm:$0xff] %vm1541, %v1536
      %1546 = vst.msk [vmem:[%s213 + $0x20] sm:$0xff] %vm1541, %v1537
      %1547 = vst.msk [vmem:[%s213 + $0x28] sm:$0xff] %vm1541, %v1538
      %1548 = vst.msk [vmem:[%s213 + $0x30] sm:$0xff] %vm1541, %v1539
      %1549 = vst.msk [vmem:[%s213 + $0x38] sm:$0xff] %vm1541, %v1540
      %v1550 = vsel %vm1541, %v1533, 0.0
      %v1551 = vsel %vm1541, %v1534, 0.0
      %v1552 = vadd.f32 %v1550, %v1551
      %v1553 = vsel %vm1541, %v1535, 0.0
      %v1554 = vadd.f32 %v1552, %v1553
      %v1555 = vsel %vm1541, %v1536, 0.0
      %v1556 = vadd.f32 %v1554, %v1555
      %v1557 = vsel %vm1541, %v1537, 0.0
      %v1558 = vadd.f32 %v1556, %v1557
      %v1559 = vsel %vm1541, %v1538, 0.0
      %v1560 = vadd.f32 %v1558, %v1559
      %v1561 = vsel %vm1541, %v1539, 0.0
      %v1562 = vadd.f32 %v1560, %v1561
      %v1563 = vsel %vm1541, %v1540, 0.0
      %v1564 = vadd.f32 %v1562, %v1563
      %v1565 = vrot.slane %v1564, 4
      %v1566 = vadd.f32 %v1564, %v1565
      %v1567 = vrot.slane %v1566, 2
      %v1568 = vadd.f32 %v1566, %v1567
      %v1569 = vrot.slane %v1568, 1
      %v1570 = vadd.f32 %v1568, %v1569
      %vm1571 = vcmask 253952
      %1572 = vst.msk [vmem:[%s216] sm:$0x1] %vm1571, %v1570
      %v1573 = vmul.f32 %v1533, %v1533
      %v1574 = vmul.f32 %v1534, %v1534
      %v1575 = vmul.f32 %v1535, %v1535
      %v1576 = vmul.f32 %v1536, %v1536
      %v1577 = vmul.f32 %v1537, %v1537
      %v1578 = vmul.f32 %v1538, %v1538
      %v1579 = vmul.f32 %v1539, %v1539
      %v1580 = vmul.f32 %v1540, %v1540
      %v1581 = vsel %vm1541, %v1573, 0.0
      %v1582 = vsel %vm1541, %v1574, 0.0
      %v1583 = vadd.f32 %v1581, %v1582
      %v1584 = vsel %vm1541, %v1575, 0.0
      %v1585 = vadd.f32 %v1583, %v1584
      %v1586 = vsel %vm1541, %v1576, 0.0
      %v1587 = vadd.f32 %v1585, %v1586
      %v1588 = vsel %vm1541, %v1577, 0.0
      %v1589 = vadd.f32 %v1587, %v1588
      %v1590 = vsel %vm1541, %v1578, 0.0
      %v1591 = vadd.f32 %v1589, %v1590
      %v1592 = vsel %vm1541, %v1579, 0.0
      %v1593 = vadd.f32 %v1591, %v1592
      %v1594 = vsel %vm1541, %v1580, 0.0
      %v1595 = vadd.f32 %v1593, %v1594
      %v1596 = vrot.slane %v1595, 4
      %v1597 = vadd.f32 %v1595, %v1596
      %v1598 = vrot.slane %v1597, 2
      %v1599 = vadd.f32 %v1597, %v1598
      %v1600 = vrot.slane %v1599, 1
      %v1601 = vadd.f32 %v1599, %v1600
      %1602 = vst.msk [vmem:[%s219] sm:$0x1] %vm1571, %v1601
      %p1603 = scmp.lt.s32.totalorder %s16, 1
      %s1604 = scalar_select %p1603, %s16, 1
      %s1605 = smul.addr %s1604, 8
      %s1606 = smul.addr %s1605, 8
      %s1607 = scalar_lea.vmem %s2, %s1606
      %p1608 = scmp.lt.s32.totalorder %s16, 1
      %s1609 = scalar_select %p1608, %s16, 1
      %s1610 = scalar_lea.vmem %s3, %s1609
      %p1611 = scmp.lt.s32.totalorder %s16, 1
      %s1612 = scalar_select %p1611, %s16, 1
      %s1613 = scalar_lea.vmem %s4, %s1612
      // Predicated region
      $region29: #{group2_forward.2} parent=27 // pred_check
        %p1614 = pneg %p81
      $region30: #{group2_forward.2} parent=27 // pred_check_branch
        %1616 = sbr.rel (%p1614) target = $region32
      $region31: #{group2_forward.2} parent=27 // pred_region
        _
      $region32: #{group2_forward.2} parent=27 // pred_fallthru
        _
      // Predicated region
      $region33: #{group2_forward.2} parent=27 // pred_check
        %p1617 = pneg %p107
      $region34: #{group2_forward.2} parent=27 // pred_check_branch
        %1619 = sbr.rel (%p1617) target = $region36
      $region35: #{group2_forward.2} parent=27 // pred_region
        _
      $region36: #{group2_forward.2} parent=27 // pred_fallthru
        _
      // Predicated region
      $region37: #{group2_forward.2} parent=27 // pred_check
        %p1620 = pneg %p133
      $region38: #{group2_forward.2} parent=27 // pred_check_branch
        %1622 = sbr.rel (%p1620) target = $region40
      $region39: #{group2_forward.2} parent=27 // pred_region
        _
      $region40: #{group2_forward.2} parent=27 // pred_fallthru
        _
    $region28: #{group2_forward.2} parent=5 // pred_fallthru
      _
    %p1623 = scmp.le.s32.totalorder 2, %s11
    // Predicated region
    $region41: #{group2_forward.2} parent=5 // pred_check
      %p1624 = pneg %p1623
    $region42: #{group2_forward.2} parent=5 // pred_check_branch
      %1626 = sbr.rel (%p1624) target = $region44
    $region43: #{group2_forward.2} parent=5 // pred_region
      %s1627 = ssub.s32 %s11, 2
      // Predicated region
      $region45: #{group2_forward.2} parent=43 // pred_check
        %p1628 = pneg %p87
      $region46: #{group2_forward.2} parent=43 // pred_check_branch
        %1630 = sbr.rel (%p1628) target = $region48
      $region47: #{group2_forward.2} parent=43 // pred_region
        %p1631 = scmp.lt.s32.totalorder %s17, 1
        %s1632 = scalar_select %p1631, %s17, 1
        %s1633 = smul.addr %s1632, 8
        %s1634 = smul.addr %s1633, 8
        %s1635 = scalar_lea.vmem %s2, %s1634
      $region48: #{group2_forward.2} parent=43 // pred_fallthru
        _
      // Predicated region
      $region49: #{group2_forward.2} parent=43 // pred_check
        %p1636 = pneg %p113
      $region50: #{group2_forward.2} parent=43 // pred_check_branch
        %1638 = sbr.rel (%p1636) target = $region52
      $region51: #{group2_forward.2} parent=43 // pred_region
        %p1639 = scmp.lt.s32.totalorder %s17, 1
        %s1640 = scalar_select %p1639, %s17, 1
        %s1641 = scalar_lea.vmem %s3, %s1640
      $region52: #{group2_forward.2} parent=43 // pred_fallthru
        _
      // Predicated region
      $region53: #{group2_forward.2} parent=43 // pred_check
        %p1642 = pneg %p139
      $region54: #{group2_forward.2} parent=43 // pred_check_branch
        %1644 = sbr.rel (%p1642) target = $region56
      $region55: #{group2_forward.2} parent=43 // pred_region
        %p1645 = scmp.lt.s32.totalorder %s17, 1
        %s1646 = scalar_select %p1645, %s17, 1
        %s1647 = scalar_lea.vmem %s4, %s1646
      $region56: #{group2_forward.2} parent=43 // pred_fallthru
        _
    $region44: #{group2_forward.2} parent=5 // pred_fallthru
      _
  $region6: #{group2_forward.2} parent=0 // loop_footer
    %s15 = sadd.s32 1, %s11
  $region7: #{group2_forward.2} parent=0 // loop_footer_branch
    %10 = sbr.rel target = $region3
  $region8: #{group2_forward.2} parent=0 // loop_exit
    _

</llo_original>
